<compile_context>
chip_gen: v5e
topology: v5e:2x2
jax: 0.10.0
libtpu: 0.0.40
codegen_flags: <defaults>
</compile_context>

<pallas_src>
import math
import jax
import jax.numpy as jnp
from jax import lax
from jax.experimental import pallas as pl
from jax.experimental.pallas import tpu as pltpu

PI = math.pi

# ----------------------------- target config -----------------------------
ROI_PER_IMAGE     = 128
FG_RATIO          = 0.5
REG_FG_THRESH     = 0.55
CLS_FG_THRESH     = 0.75
CLS_BG_THRESH     = 0.25
CLS_BG_THRESH_LO  = 0.1
HARD_BG_RATIO     = 0.8


# =========================================================================
# Single fused kernel: IoU + assignment + gather + cls/reg target encoding
# =========================================================================
def fused_targets_kernel(rois_ref, gt_ref,
                         max_ov_ref, gtsrc_ref, cls_ref, fg_ref,
                         gtout_ref, reg_ref):
    """Per batch element inside the block:
         rois_ref[b] : (8, R)  channel-major; ch 0..6 = box, ch 7 = roi label (f32)
         gt_ref[b]   : (Gp, 8) gt boxes (zero-padded rows), ch 7 = class label
       All outputs are lane-dense (last dim = R = 128)."""
    nb = rois_ref.shape[0]
    Gp = gt_ref.shape[1]
    cls_scale = 1.0 / (CLS_FG_THRESH - CLS_BG_THRESH)

    for b in range(nb):                                   # static, unrolled
        rois = rois_ref[b]                                # (8, R)
        gt = gt_ref[b]                                    # (Gp, 8)

        rx, ryc, rz = rois[0:1], rois[1:2], rois[2:3]     # (1, R)
        rdx, rdy, rdz = rois[3:4], rois[4:5], rois[5:6]
        rrot = rois[6:7]
        rlab = rois[7:8]

        gx, gy, gz = gt[:, 0:1], gt[:, 1:2], gt[:, 2:3]   # (Gp, 1)
        gdx, gdy, gdz = gt[:, 3:4], gt[:, 4:5], gt[:, 5:6]
        gry, glab = gt[:, 6:7], gt[:, 7:8]
        # all-zero gt rows (padding) are invalid
        valid = jnp.sum(jnp.abs(gt), axis=1, keepdims=True) > 0.0   # (Gp, 1)

        # ---- class-aware pairwise IoU, (Gp, R) ----
        # TODO(synk): rotated BEV polygon intersection (iou3d_nms CUDA) has no
        # clean Pallas equivalent; axis-aligned 3D IoU approximation is used.
        ox = jnp.maximum(jnp.minimum(rx + 0.5 * rdx, gx + 0.5 * gdx)
                         - jnp.maximum(rx - 0.5 * rdx, gx - 0.5 * gdx), 0.0)
        oy = jnp.maximum(jnp.minimum(ryc + 0.5 * rdy, gy + 0.5 * gdy)
                         - jnp.maximum(ryc - 0.5 * rdy, gy - 0.5 * gdy), 0.0)
        oz = jnp.maximum(jnp.minimum(rz + 0.5 * rdz, gz + 0.5 * gdz)
                         - jnp.maximum(rz - 0.5 * rdz, gz - 0.5 * gdz), 0.0)
        inter = ox * oy * oz                               # (Gp, R)
        vol_r = rdx * rdy * rdz                            # (1, R)
        vol_g = gdx * gdy * gdz                            # (Gp, 1)
        iou = inter / jnp.maximum(vol_r + vol_g - inter, 1e-6)

        # labels are small integers -> exact in f32
        masked = jnp.where((glab == rlab) & valid, iou, -1.0)        # (Gp, R)

        best = jnp.max(masked, axis=0, keepdims=True)                # (1, R)
        gidx = lax.broadcasted_iota(jnp.int32, masked.shape, 0)
        first = jnp.min(jnp.where(masked >= best, gidx, Gp),
                        axis=0, keepdims=True)                       # (1, R), first argmax
        onehot = (gidx == first).astype(jnp.float32)                 # (Gp, R)

        max_ov = jnp.where(best < 0.0, 0.0, best)                    # (1, R)
        max_ov_ref[b] = max_ov

        # ---- in-kernel one-hot gather of the matched gt (channel-major) ----
        def gather(col):                                             # (Gp,1) -> (1,R)
            return jnp.sum(onehot * col, axis=0, keepdims=True)

        sx, sy, sz = gather(gx), gather(gy), gather(gz)
        sdx, sdy, sdz = gather(gdx), gather(gdy), gather(gdz)
        sry, slab = gather(gry), gather(glab)
        gtsrc_ref[b] = jnp.concatenate(
            [sx, sy, sz, sdx, sdy, sdz, sry, slab], axis=0)          # (8, R)

        # ---- fg mask / cls targets ----
        fg_ref[b] = (max_ov > REG_FG_THRESH).astype(jnp.int32)
        fgm = max_ov > CLS_FG_THRESH
        bgm = max_ov < CLS_BG_THRESH
        cls_ref[b] = jnp.where(
            fgm, 1.0,
            jnp.where(bgm, 0.0, (max_ov - CLS_BG_THRESH) * cls_scale))

        # ---- canonicalise gt into roi frame ----
        lx, ly, lz = sx - rx, sy - ryc, sz - rz
        lry = jnp.mod(sry, 2.0 * PI) - rrot
        c = jnp.cos(rrot)
        s = jnp.sin(rrot)
        nx = lx * c + ly * s                # rotate_points_along_z(., -roi_rot)
        ny = -lx * s + ly * c

        ry2 = jnp.mod(lry, 2.0 * PI)
        opp = (ry2 > PI * 0.5) & (ry2 < PI * 1.5)
        ry2 = jnp.where(opp, jnp.mod(ry2 - PI, 2.0 * PI), ry2)
        ry2 = jnp.where(ry2 > PI, ry2 - 2.0 * PI, ry2)
        ry2 = jnp.clip(ry2, -PI / 2.0, PI / 2.0)

        gtout_ref[b] = jnp.concatenate(
            [nx, ny, lz, sdx, sdy, sdz, ry2, slab], axis=0)          # (8, R)

        # ---- ResidualCoder_v1.encode(gt_local, rois with zero center/rot) ----
        dxa = jnp.maximum(rdx, 1e-5)
        dya = jnp.maximum(rdy, 1e-5)
        dza = jnp.maximum(rdz, 1e-5)
        dxg = jnp.maximum(sdx, 1e-5)
        dyg = jnp.maximum(sdy, 1e-5)
        dzg = jnp.maximum(sdz, 1e-5)
        inv_diag = 1.0 / jnp.sqrt(dxa * dxa + dya * dya)
        xt = nx * inv_diag
        yt = ny * inv_diag
        zt = lz / dza
        dxt = jnp.log(dxg / dxa)
        dyt = jnp.log(dyg / dya)
        dzt = jnp.log(dzg / dza)
        reg_ref[b] = jnp.concatenate(
            [xt, yt, zt, dxt, dyt, dzt, ry2, jnp.zeros_like(xt)], axis=0)


# =========================================================================
# Wrapper (layout plumbing only)
# =========================================================================
def generate_stage_two_targets(rois, roi_labels, roi_scores, gt_boxes):
    """rois: (B,R,7) f32, roi_labels: (B,R) i32, roi_scores: (B,R) f32,
       gt_boxes: (B,G,8) f32 (last channel = class label)."""
    B, R, C = rois.shape
    G = gt_boxes.shape[1]
    assert R == ROI_PER_IMAGE, "deterministic identity sampling assumes R == ROI_PER_IMAGE"
    assert C == 7 and gt_boxes.shape[-1] == 8

    # pad gt axis only up to the sublane multiple of 8 (G lives on sublanes)
    Gp = max(8, ((G + 7) // 8) * 8)

    # channel-major rois with the roi label packed into channel 7
    # (labels are small ints -> f32 round-trip is exact)
    rois_cm = jnp.concatenate(
        [jnp.transpose(rois.astype(jnp.float32), (0, 2, 1)),
         roi_labels.astype(jnp.float32)[:, None, :]], axis=1)            # (B, 8, R)
    gt_pad = jnp.zeros((B, Gp, 8), jnp.float32).at[:, :G].set(gt_boxes)  # (B, Gp, 8)

    # TODO(synk): torch trims only *trailing* all-zero gt rows; here every
    # all-zero row is marked invalid in-kernel (equivalent for well-formed padding).

    # batch blocking: >= 2 grid steps keeps both v7x TensorCores busy while
    # adding at most one extra ~0.35us step on single-TC chips (v5e/v6e).
    nsteps = 2 if B >= 2 else 1
    block_B = pl.cdiv(B, nsteps)
    Bp = nsteps * block_B
    if Bp != B:
        rois_cm = jnp.pad(rois_cm, ((0, Bp - B), (0, 0), (0, 0)))
        gt_pad = jnp.pad(gt_pad, ((0, Bp - B), (0, 0), (0, 0)))

    out_shapes = (jax.ShapeDtypeStruct((Bp, 1, R), jnp.float32),   # roi_iou3d
                  jax.ShapeDtypeStruct((Bp, 8, R), jnp.float32),   # gt_of_rois_src (cm)
                  jax.ShapeDtypeStruct((Bp, 1, R), jnp.float32),   # rcnn_cls_targets
                  jax.ShapeDtypeStruct((Bp, 1, R), jnp.int32),     # fg_valid_reg_mask
                  jax.ShapeDtypeStruct((Bp, 8, R), jnp.float32),   # gt_of_rois (cm)
                  jax.ShapeDtypeStruct((Bp, 8, R), jnp.float32))   # rcnn_reg_targets (cm)

    max_ov, gtsrc_cm, cls_t, fg_m, gtout_cm, reg_cm = pl.pallas_call(
        fused_targets_kernel,
        out_shape=out_shapes,
        grid=(nsteps,),
        in_specs=[pl.BlockSpec((block_B, 8, R),  lambda i: (i, 0, 0)),
                  pl.BlockSpec((block_B, Gp, 8), lambda i: (i, 0, 0))],
        out_specs=(pl.BlockSpec((block_B, 1, R), lambda i: (i, 0, 0)),
                   pl.BlockSpec((block_B, 8, R), lambda i: (i, 0, 0)),
                   pl.BlockSpec((block_B, 1, R), lambda i: (i, 0, 0)),
                   pl.BlockSpec((block_B, 1, R), lambda i: (i, 0, 0)),
                   pl.BlockSpec((block_B, 8, R), lambda i: (i, 0, 0)),
                   pl.BlockSpec((block_B, 8, R), lambda i: (i, 0, 0))),
        compiler_params=pltpu.CompilerParams(
            dimension_semantics=("parallel",)),
    )(rois_cm, gt_pad)

    # strip batch padding and restore the reference (B, R, C) layouts
    max_overlap = max_ov[:B, 0]                                  # (B, R)
    gt_of_rois_src = jnp.transpose(gtsrc_cm[:B], (0, 2, 1))      # (B, R, 8)
    gt_of_rois = jnp.transpose(gtout_cm[:B], (0, 2, 1))          # (B, R, 8)
    rcnn_reg_targets = jnp.transpose(reg_cm[:B], (0, 2, 1))[..., :7]

    # TODO(synk): stochastic fg/bg balanced subsampling (torch.randint + nonzero
    # with dynamic shapes) replaced by deterministic identity sampling.
    return {
        'rois': rois,
        'roi_scores': roi_scores,
        'roi_labels': roi_labels,
        'gt_of_rois_src': gt_of_rois_src,
        'gt_of_rois': gt_of_rois,
        'roi_iou3d': max_overlap,
        'fg_valid_reg_mask': fg_m[:B, 0],
        'rcnn_reg_targets': rcnn_reg_targets,
        'rcnn_reg_corners_target': gt_of_rois_src,
        'rcnn_cls_targets': cls_t[:B, 0],
    }


# =========================================================================
if __name__ == "__main__":
    key = jax.random.PRNGKey(0)
    B, R, G = 2, ROI_PER_IMAGE, 16

    k1, k2, k3, k4, k5, k6, k7, k8 = jax.random.split(key, 8)

    # ground-truth boxes: [x, y, z, dx, dy, dz, ry, label]
    gt_xy = jax.random.uniform(k1, (B, G, 2), minval=-20.0, maxval=20.0)
    gt_z = jax.random.uniform(k2, (B, G, 1), minval=-2.0, maxval=0.0)
    gt_dim = jax.random.uniform(k3, (B, G, 3), minval=1.5, maxval=4.0)
    gt_ry = jax.random.uniform(k4, (B, G, 1), minval=-PI, maxval=PI)
    gt_lab = jax.random.randint(k5, (B, G, 1), 1, 4).astype(jnp.float32)
    gt_boxes = jnp.concatenate([gt_xy, gt_z, gt_dim, gt_ry, gt_lab], axis=-1)
    # zero out a few trailing gts (padding rows)
    gt_boxes = gt_boxes.at[0, 12:].set(0.0)
    gt_boxes = gt_boxes.at[1, 14:].set(0.0)

    # proposals
    roi_xy = jax.random.uniform(k6, (B, R, 2), minval=-20.0, maxval=20.0)
    roi_z = jax.random.uniform(k7, (B, R, 1), minval=-2.0, maxval=0.0)
    roi_dim = jax.random.uniform(k8, (B, R, 3), minval=1.5, maxval=4.0)
    roi_ry = jax.random.uniform(k1, (B, R, 1), minval=-PI, maxval=PI)
    rois = jnp.concatenate([roi_xy, roi_z, roi_dim, roi_ry], axis=-1)
    roi_labels = jax.random.randint(k2, (B, R), 1, 4)
    roi_scores = jax.random.uniform(k3, (B, R))

    # make the first 8 rois per image overlap actual gts (fg samples)
    noise = 0.05 * jax.random.normal(k4, (B, 8, 7))
    rois = rois.at[:, :8, :].set(gt_boxes[:, :8, :7] + noise)
    roi_labels = roi_labels.at[:, :8].set(gt_boxes[:, :8, 7].astype(jnp.int32))

    ret = generate_stage_two_targets(rois, roi_labels, roi_scores, gt_boxes)
    jax.block_until_ready(ret)

    # sanity: no NaNs in the reg/cls targets
    assert bool(jnp.all(jnp.isfinite(ret['rcnn_reg_targets'])))
    assert bool(jnp.all(jnp.isfinite(ret['rcnn_cls_targets'])))
    print("KERNEL_OK")
</pallas_src>

<mosaic_0001>
module attributes {stable_mosaic.version = 11 : i64} {
  func.func @fused_targets_kernel(%arg0: i32, %arg1: memref<1x8x128xf32, #tpu.memory_space<vmem>>, %arg2: memref<1x16x8xf32, #tpu.memory_space<vmem>>, %arg3: memref<1x1x128xf32, #tpu.memory_space<vmem>>, %arg4: memref<1x8x128xf32, #tpu.memory_space<vmem>>, %arg5: memref<1x1x128xf32, #tpu.memory_space<vmem>>, %arg6: memref<1x1x128xi32, #tpu.memory_space<vmem>>, %arg7: memref<1x8x128xf32, #tpu.memory_space<vmem>>, %arg8: memref<1x8x128xf32, #tpu.memory_space<vmem>>) attributes {dimension_semantics = [#tpu.dimension_semantics<parallel>], iteration_bounds = array<i64: 2>, scalar_prefetch = 0 : i64, scratch_operands = 0 : i64, tpu.core_type = #tpu.core_type<tc>, window_params = [{transform_indices = @transform_0, window_bounds = array<i64: 1, 8, 128>}, {transform_indices = @transform_1, window_bounds = array<i64: 1, 16, 8>}, {transform_indices = @transform_2, window_bounds = array<i64: 1, 1, 128>}, {transform_indices = @transform_3, window_bounds = array<i64: 1, 8, 128>}, {transform_indices = @transform_4, window_bounds = array<i64: 1, 1, 128>}, {transform_indices = @transform_5, window_bounds = array<i64: 1, 1, 128>}, {transform_indices = @transform_6, window_bounds = array<i64: 1, 8, 128>}, {transform_indices = @transform_7, window_bounds = array<i64: 1, 8, 128>}]} {
    %c0 = arith.constant 0 : index
    %c0_0 = arith.constant 0 : index
    %c0_1 = arith.constant 0 : index
    %0 = vector.load %arg1[%c0, %c0_0, %c0_1] : memref<1x8x128xf32, #tpu.memory_space<vmem>>, vector<1x8x128xf32>
    %1 = vector.shape_cast %0 : vector<1x8x128xf32> to vector<8x128xf32>
    %c0_2 = arith.constant 0 : index
    %c0_3 = arith.constant 0 : index
    %c0_4 = arith.constant 0 : index
    %2 = vector.load %arg2[%c0_2, %c0_3, %c0_4] : memref<1x16x8xf32, #tpu.memory_space<vmem>>, vector<1x16x8xf32>
    %3 = vector.shape_cast %2 : vector<1x16x8xf32> to vector<16x8xf32>
    %4 = vector.extract_strided_slice %1 {offsets = [0, 0], sizes = [1, 128], strides = [1, 1]} : vector<8x128xf32> to vector<1x128xf32>
    %5 = vector.extract_strided_slice %1 {offsets = [1, 0], sizes = [1, 128], strides = [1, 1]} : vector<8x128xf32> to vector<1x128xf32>
    %6 = vector.extract_strided_slice %1 {offsets = [2, 0], sizes = [1, 128], strides = [1, 1]} : vector<8x128xf32> to vector<1x128xf32>
    %7 = vector.extract_strided_slice %1 {offsets = [3, 0], sizes = [1, 128], strides = [1, 1]} : vector<8x128xf32> to vector<1x128xf32>
    %8 = vector.extract_strided_slice %1 {offsets = [4, 0], sizes = [1, 128], strides = [1, 1]} : vector<8x128xf32> to vector<1x128xf32>
    %9 = vector.extract_strided_slice %1 {offsets = [5, 0], sizes = [1, 128], strides = [1, 1]} : vector<8x128xf32> to vector<1x128xf32>
    %10 = vector.extract_strided_slice %1 {offsets = [6, 0], sizes = [1, 128], strides = [1, 1]} : vector<8x128xf32> to vector<1x128xf32>
    %11 = vector.extract_strided_slice %1 {offsets = [7, 0], sizes = [1, 128], strides = [1, 1]} : vector<8x128xf32> to vector<1x128xf32>
    %12 = vector.extract_strided_slice %3 {offsets = [0, 0], sizes = [16, 1], strides = [1, 1]} : vector<16x8xf32> to vector<16x1xf32>
    %13 = vector.extract_strided_slice %3 {offsets = [0, 1], sizes = [16, 1], strides = [1, 1]} : vector<16x8xf32> to vector<16x1xf32>
    %14 = vector.extract_strided_slice %3 {offsets = [0, 2], sizes = [16, 1], strides = [1, 1]} : vector<16x8xf32> to vector<16x1xf32>
    %15 = vector.extract_strided_slice %3 {offsets = [0, 3], sizes = [16, 1], strides = [1, 1]} : vector<16x8xf32> to vector<16x1xf32>
    %16 = vector.extract_strided_slice %3 {offsets = [0, 4], sizes = [16, 1], strides = [1, 1]} : vector<16x8xf32> to vector<16x1xf32>
    %17 = vector.extract_strided_slice %3 {offsets = [0, 5], sizes = [16, 1], strides = [1, 1]} : vector<16x8xf32> to vector<16x1xf32>
    %18 = vector.extract_strided_slice %3 {offsets = [0, 6], sizes = [16, 1], strides = [1, 1]} : vector<16x8xf32> to vector<16x1xf32>
    %19 = vector.extract_strided_slice %3 {offsets = [0, 7], sizes = [16, 1], strides = [1, 1]} : vector<16x8xf32> to vector<16x1xf32>
    %20 = math.absf %3 : vector<16x8xf32>
    %cst = arith.constant dense<0.000000e+00> : vector<16xf32>
    %21 = vector.multi_reduction <add>, %20, %cst [1] : vector<16x8xf32> to vector<16xf32>
    %22 = vector.shape_cast %21 : vector<16xf32> to vector<16x1xf32>
    %cst_5 = arith.constant 0.000000e+00 : f32
    %23 = vector.broadcast %cst_5 : f32 to vector<16x1xf32>
    %24 = arith.cmpf ogt, %22, %23 : vector<16x1xf32>
    %cst_6 = arith.constant 5.000000e-01 : f32
    %25 = vector.broadcast %cst_6 : f32 to vector<1x128xf32>
    %26 = arith.mulf %25, %7 : vector<1x128xf32>
    %27 = arith.addf %4, %26 : vector<1x128xf32>
    %cst_7 = arith.constant 5.000000e-01 : f32
    %28 = vector.broadcast %cst_7 : f32 to vector<16x1xf32>
    %29 = arith.mulf %28, %15 : vector<16x1xf32>
    %30 = arith.addf %12, %29 : vector<16x1xf32>
    %31 = vector.broadcast %27 : vector<1x128xf32> to vector<16x128xf32>
    %32 = vector.broadcast %30 : vector<16x1xf32> to vector<16x128xf32>
    %33 = arith.minimumf %31, %32 : vector<16x128xf32>
    %cst_8 = arith.constant 5.000000e-01 : f32
    %34 = vector.broadcast %cst_8 : f32 to vector<1x128xf32>
    %35 = arith.mulf %34, %7 : vector<1x128xf32>
    %36 = arith.subf %4, %35 : vector<1x128xf32>
    %cst_9 = arith.constant 5.000000e-01 : f32
    %37 = vector.broadcast %cst_9 : f32 to vector<16x1xf32>
    %38 = arith.mulf %37, %15 : vector<16x1xf32>
    %39 = arith.subf %12, %38 : vector<16x1xf32>
    %40 = vector.broadcast %36 : vector<1x128xf32> to vector<16x128xf32>
    %41 = vector.broadcast %39 : vector<16x1xf32> to vector<16x128xf32>
    %42 = arith.maximumf %40, %41 : vector<16x128xf32>
    %43 = arith.subf %33, %42 : vector<16x128xf32>
    %cst_10 = arith.constant 0.000000e+00 : f32
    %44 = vector.broadcast %cst_10 : f32 to vector<16x128xf32>
    %45 = arith.maximumf %43, %44 : vector<16x128xf32>
    %cst_11 = arith.constant 5.000000e-01 : f32
    %46 = vector.broadcast %cst_11 : f32 to vector<1x128xf32>
    %47 = arith.mulf %46, %8 : vector<1x128xf32>
    %48 = arith.addf %5, %47 : vector<1x128xf32>
    %cst_12 = arith.constant 5.000000e-01 : f32
    %49 = vector.broadcast %cst_12 : f32 to vector<16x1xf32>
    %50 = arith.mulf %49, %16 : vector<16x1xf32>
    %51 = arith.addf %13, %50 : vector<16x1xf32>
    %52 = vector.broadcast %48 : vector<1x128xf32> to vector<16x128xf32>
    %53 = vector.broadcast %51 : vector<16x1xf32> to vector<16x128xf32>
    %54 = arith.minimumf %52, %53 : vector<16x128xf32>
    %cst_13 = arith.constant 5.000000e-01 : f32
    %55 = vector.broadcast %cst_13 : f32 to vector<1x128xf32>
    %56 = arith.mulf %55, %8 : vector<1x128xf32>
    %57 = arith.subf %5, %56 : vector<1x128xf32>
    %cst_14 = arith.constant 5.000000e-01 : f32
    %58 = vector.broadcast %cst_14 : f32 to vector<16x1xf32>
    %59 = arith.mulf %58, %16 : vector<16x1xf32>
    %60 = arith.subf %13, %59 : vector<16x1xf32>
    %61 = vector.broadcast %57 : vector<1x128xf32> to vector<16x128xf32>
    %62 = vector.broadcast %60 : vector<16x1xf32> to vector<16x128xf32>
    %63 = arith.maximumf %61, %62 : vector<16x128xf32>
    %64 = arith.subf %54, %63 : vector<16x128xf32>
    %cst_15 = arith.constant 0.000000e+00 : f32
    %65 = vector.broadcast %cst_15 : f32 to vector<16x128xf32>
    %66 = arith.maximumf %64, %65 : vector<16x128xf32>
    %cst_16 = arith.constant 5.000000e-01 : f32
    %67 = vector.broadcast %cst_16 : f32 to vector<1x128xf32>
    %68 = arith.mulf %67, %9 : vector<1x128xf32>
    %69 = arith.addf %6, %68 : vector<1x128xf32>
    %cst_17 = arith.constant 5.000000e-01 : f32
    %70 = vector.broadcast %cst_17 : f32 to vector<16x1xf32>
    %71 = arith.mulf %70, %17 : vector<16x1xf32>
    %72 = arith.addf %14, %71 : vector<16x1xf32>
    %73 = vector.broadcast %69 : vector<1x128xf32> to vector<16x128xf32>
    %74 = vector.broadcast %72 : vector<16x1xf32> to vector<16x128xf32>
    %75 = arith.minimumf %73, %74 : vector<16x128xf32>
    %cst_18 = arith.constant 5.000000e-01 : f32
    %76 = vector.broadcast %cst_18 : f32 to vector<1x128xf32>
    %77 = arith.mulf %76, %9 : vector<1x128xf32>
    %78 = arith.subf %6, %77 : vector<1x128xf32>
    %cst_19 = arith.constant 5.000000e-01 : f32
    %79 = vector.broadcast %cst_19 : f32 to vector<16x1xf32>
    %80 = arith.mulf %79, %17 : vector<16x1xf32>
    %81 = arith.subf %14, %80 : vector<16x1xf32>
    %82 = vector.broadcast %78 : vector<1x128xf32> to vector<16x128xf32>
    %83 = vector.broadcast %81 : vector<16x1xf32> to vector<16x128xf32>
    %84 = arith.maximumf %82, %83 : vector<16x128xf32>
    %85 = arith.subf %75, %84 : vector<16x128xf32>
    %cst_20 = arith.constant 0.000000e+00 : f32
    %86 = vector.broadcast %cst_20 : f32 to vector<16x128xf32>
    %87 = arith.maximumf %85, %86 : vector<16x128xf32>
    %88 = arith.mulf %45, %66 : vector<16x128xf32>
    %89 = arith.mulf %88, %87 : vector<16x128xf32>
    %90 = arith.mulf %7, %8 : vector<1x128xf32>
    %91 = arith.mulf %90, %9 : vector<1x128xf32>
    %92 = arith.mulf %15, %16 : vector<16x1xf32>
    %93 = arith.mulf %92, %17 : vector<16x1xf32>
    %94 = vector.broadcast %91 : vector<1x128xf32> to vector<16x128xf32>
    %95 = vector.broadcast %93 : vector<16x1xf32> to vector<16x128xf32>
    %96 = arith.addf %94, %95 : vector<16x128xf32>
    %97 = arith.subf %96, %89 : vector<16x128xf32>
    %cst_21 = arith.constant 9.99999997E-7 : f32
    %98 = vector.broadcast %cst_21 : f32 to vector<16x128xf32>
    %99 = arith.maximumf %97, %98 : vector<16x128xf32>
    %100 = arith.divf %89, %99 : vector<16x128xf32>
    %101 = vector.broadcast %19 : vector<16x1xf32> to vector<16x128xf32>
    %102 = vector.broadcast %11 : vector<1x128xf32> to vector<16x128xf32>
    %103 = arith.cmpf oeq, %101, %102 : vector<16x128xf32>
    %104 = vector.broadcast %24 : vector<16x1xi1> to vector<16x128xi1>
    %105 = arith.andi %103, %104 : vector<16x128xi1>
    %cst_22 = arith.constant -1.000000e+00 : f32
    %106 = vector.broadcast %cst_22 : f32 to vector<16x128xf32>
    %107 = arith.select %105, %100, %106 : vector<16x128xi1>, vector<16x128xf32>
    %cst_23 = arith.constant dense<0xFF800000> : vector<128xf32>
    %108 = vector.multi_reduction <maximumf>, %107, %cst_23 [0] : vector<16x128xf32> to vector<128xf32>
    %109 = vector.shape_cast %108 : vector<128xf32> to vector<1x128xf32>
    %110 = tpu.iota {dimensions = array<i32: 0>} : vector<16x128xi32>
    %111 = vector.broadcast %109 : vector<1x128xf32> to vector<16x128xf32>
    %112 = arith.cmpf oge, %107, %111 : vector<16x128xf32>
    %c16_i32 = arith.constant 16 : i32
    %113 = vector.broadcast %c16_i32 : i32 to vector<16x128xi32>
    %114 = arith.select %112, %110, %113 : vector<16x128xi1>, vector<16x128xi32>
    %cst_24 = arith.constant dense<2147483647> : vector<128xi32>
    %115 = vector.multi_reduction <minsi>, %114, %cst_24 [0] : vector<16x128xi32> to vector<128xi32>
    %116 = vector.shape_cast %115 : vector<128xi32> to vector<1x128xi32>
    %117 = vector.broadcast %116 : vector<1x128xi32> to vector<16x128xi32>
    %118 = arith.cmpi eq, %110, %117 : vector<16x128xi32>
    %119 = arith.extui %118 : vector<16x128xi1> to vector<16x128xi32>
    %120 = arith.sitofp %119 : vector<16x128xi32> to vector<16x128xf32>
    %cst_25 = arith.constant 0.000000e+00 : f32
    %121 = vector.broadcast %cst_25 : f32 to vector<1x128xf32>
    %122 = arith.cmpf olt, %109, %121 : vector<1x128xf32>
    %cst_26 = arith.constant 0.000000e+00 : f32
    %123 = vector.broadcast %cst_26 : f32 to vector<1x128xf32>
    %124 = arith.select %122, %123, %109 : vector<1x128xi1>, vector<1x128xf32>
    %c0_27 = arith.constant 0 : index
    %c0_28 = arith.constant 0 : index
    %c0_29 = arith.constant 0 : index
    %125 = vector.load %arg3[%c0_27, %c0_28, %c0_29] : memref<1x1x128xf32, #tpu.memory_space<vmem>>, vector<1x1x128xf32>
    %126 = vector.shape_cast %125 : vector<1x1x128xf32> to vector<1x128xf32>
    %127 = vector.shape_cast %124 : vector<1x128xf32> to vector<1x1x128xf32>
    tpu.vector_store %arg3[%c0_27, %c0_28, %c0_29], %127 {strides = array<i32>} : memref<1x1x128xf32, #tpu.memory_space<vmem>>, vector<1x1x128xf32>,
    %128 = vector.broadcast %12 : vector<16x1xf32> to vector<16x128xf32>
    %129 = arith.mulf %120, %128 : vector<16x128xf32>
    %cst_30 = arith.constant dense<0.000000e+00> : vector<128xf32>
    %130 = vector.multi_reduction <add>, %129, %cst_30 [0] : vector<16x128xf32> to vector<128xf32>
    %131 = vector.shape_cast %130 : vector<128xf32> to vector<1x128xf32>
    %132 = vector.broadcast %13 : vector<16x1xf32> to vector<16x128xf32>
    %133 = arith.mulf %120, %132 : vector<16x128xf32>
    %cst_31 = arith.constant dense<0.000000e+00> : vector<128xf32>
    %134 = vector.multi_reduction <add>, %133, %cst_31 [0] : vector<16x128xf32> to vector<128xf32>
    %135 = vector.shape_cast %134 : vector<128xf32> to vector<1x128xf32>
    %136 = vector.broadcast %14 : vector<16x1xf32> to vector<16x128xf32>
    %137 = arith.mulf %120, %136 : vector<16x128xf32>
    %cst_32 = arith.constant dense<0.000000e+00> : vector<128xf32>
    %138 = vector.multi_reduction <add>, %137, %cst_32 [0] : vector<16x128xf32> to vector<128xf32>
    %139 = vector.shape_cast %138 : vector<128xf32> to vector<1x128xf32>
    %140 = vector.broadcast %15 : vector<16x1xf32> to vector<16x128xf32>
    %141 = arith.mulf %120, %140 : vector<16x128xf32>
    %cst_33 = arith.constant dense<0.000000e+00> : vector<128xf32>
    %142 = vector.multi_reduction <add>, %141, %cst_33 [0] : vector<16x128xf32> to vector<128xf32>
    %143 = vector.shape_cast %142 : vector<128xf32> to vector<1x128xf32>
    %144 = vector.broadcast %16 : vector<16x1xf32> to vector<16x128xf32>
    %145 = arith.mulf %120, %144 : vector<16x128xf32>
    %cst_34 = arith.constant dense<0.000000e+00> : vector<128xf32>
    %146 = vector.multi_reduction <add>, %145, %cst_34 [0] : vector<16x128xf32> to vector<128xf32>
    %147 = vector.shape_cast %146 : vector<128xf32> to vector<1x128xf32>
    %148 = vector.broadcast %17 : vector<16x1xf32> to vector<16x128xf32>
    %149 = arith.mulf %120, %148 : vector<16x128xf32>
    %cst_35 = arith.constant dense<0.000000e+00> : vector<128xf32>
    %150 = vector.multi_reduction <add>, %149, %cst_35 [0] : vector<16x128xf32> to vector<128xf32>
    %151 = vector.shape_cast %150 : vector<128xf32> to vector<1x128xf32>
    %152 = vector.broadcast %18 : vector<16x1xf32> to vector<16x128xf32>
    %153 = arith.mulf %120, %152 : vector<16x128xf32>
    %cst_36 = arith.constant dense<0.000000e+00> : vector<128xf32>
    %154 = vector.multi_reduction <add>, %153, %cst_36 [0] : vector<16x128xf32> to vector<128xf32>
    %155 = vector.shape_cast %154 : vector<128xf32> to vector<1x128xf32>
    %156 = vector.broadcast %19 : vector<16x1xf32> to vector<16x128xf32>
    %157 = arith.mulf %120, %156 : vector<16x128xf32>
    %cst_37 = arith.constant dense<0.000000e+00> : vector<128xf32>
    %158 = vector.multi_reduction <add>, %157, %cst_37 [0] : vector<16x128xf32> to vector<128xf32>
    %159 = vector.shape_cast %158 : vector<128xf32> to vector<1x128xf32>
    %160 = tpu.concatenate %131, %135, %139, %143, %147, %151, %155, %159 in 0 : vector<1x128xf32>, vector<1x128xf32>, vector<1x128xf32>, vector<1x128xf32>, vector<1x128xf32>, vector<1x128xf32>, vector<1x128xf32>, vector<1x128xf32> -> vector<8x128xf32>
    %c0_38 = arith.constant 0 : index
    %c0_39 = arith.constant 0 : index
    %c0_40 = arith.constant 0 : index
    %161 = vector.load %arg4[%c0_38, %c0_39, %c0_40] : memref<1x8x128xf32, #tpu.memory_space<vmem>>, vector<1x8x128xf32>
    %162 = vector.shape_cast %161 : vector<1x8x128xf32> to vector<8x128xf32>
    %163 = vector.shape_cast %160 : vector<8x128xf32> to vector<1x8x128xf32>
    tpu.vector_store %arg4[%c0_38, %c0_39, %c0_40], %163 {strides = array<i32>} : memref<1x8x128xf32, #tpu.memory_space<vmem>>, vector<1x8x128xf32>,
    %cst_41 = arith.constant 5.500000e-01 : f32
    %164 = vector.broadcast %cst_41 : f32 to vector<1x128xf32>
    %165 = arith.cmpf ogt, %124, %164 : vector<1x128xf32>
    %166 = arith.extui %165 : vector<1x128xi1> to vector<1x128xi32>
    %c0_42 = arith.constant 0 : index
    %c0_43 = arith.constant 0 : index
    %c0_44 = arith.constant 0 : index
    %167 = vector.load %arg6[%c0_42, %c0_43, %c0_44] : memref<1x1x128xi32, #tpu.memory_space<vmem>>, vector<1x1x128xi32>
    %168 = vector.shape_cast %167 : vector<1x1x128xi32> to vector<1x128xi32>
    %169 = vector.shape_cast %166 : vector<1x128xi32> to vector<1x1x128xi32>
    tpu.vector_store %arg6[%c0_42, %c0_43, %c0_44], %169 {strides = array<i32>} : memref<1x1x128xi32, #tpu.memory_space<vmem>>, vector<1x1x128xi32>,
    %cst_45 = arith.constant 7.500000e-01 : f32
    %170 = vector.broadcast %cst_45 : f32 to vector<1x128xf32>
    %171 = arith.cmpf ogt, %124, %170 : vector<1x128xf32>
    %cst_46 = arith.constant 2.500000e-01 : f32
    %172 = vector.broadcast %cst_46 : f32 to vector<1x128xf32>
    %173 = arith.cmpf olt, %124, %172 : vector<1x128xf32>
    %cst_47 = arith.constant 2.500000e-01 : f32
    %174 = vector.broadcast %cst_47 : f32 to vector<1x128xf32>
    %175 = arith.subf %124, %174 : vector<1x128xf32>
    %cst_48 = arith.constant 2.000000e+00 : f32
    %176 = vector.broadcast %cst_48 : f32 to vector<1x128xf32>
    %177 = arith.mulf %175, %176 : vector<1x128xf32>
    %cst_49 = arith.constant 0.000000e+00 : f32
    %178 = vector.broadcast %cst_49 : f32 to vector<1x128xf32>
    %179 = arith.select %173, %178, %177 : vector<1x128xi1>, vector<1x128xf32>
    %cst_50 = arith.constant 1.000000e+00 : f32
    %180 = vector.broadcast %cst_50 : f32 to vector<1x128xf32>
    %181 = arith.select %171, %180, %179 : vector<1x128xi1>, vector<1x128xf32>
    %c0_51 = arith.constant 0 : index
    %c0_52 = arith.constant 0 : index
    %c0_53 = arith.constant 0 : index
    %182 = vector.load %arg5[%c0_51, %c0_52, %c0_53] : memref<1x1x128xf32, #tpu.memory_space<vmem>>, vector<1x1x128xf32>
    %183 = vector.shape_cast %182 : vector<1x1x128xf32> to vector<1x128xf32>
    %184 = vector.shape_cast %181 : vector<1x128xf32> to vector<1x1x128xf32>
    tpu.vector_store %arg5[%c0_51, %c0_52, %c0_53], %184 {strides = array<i32>} : memref<1x1x128xf32, #tpu.memory_space<vmem>>, vector<1x1x128xf32>,
    %185 = arith.subf %131, %4 : vector<1x128xf32>
    %186 = arith.subf %135, %5 : vector<1x128xf32>
    %187 = arith.subf %139, %6 : vector<1x128xf32>
    %cst_54 = arith.constant 6.28318548 : f32
    %188 = vector.broadcast %cst_54 : f32 to vector<1x128xf32>
    %189 = arith.remf %155, %188 : vector<1x128xf32>
    %cst_55 = arith.constant 0.000000e+00 : f32
    %190 = vector.broadcast %cst_55 : f32 to vector<1x128xf32>
    %191 = arith.cmpf one, %189, %190 : vector<1x128xf32>
    %cst_56 = arith.constant 0.000000e+00 : f32
    %192 = vector.broadcast %cst_56 : f32 to vector<1x128xf32>
    %193 = arith.cmpf olt, %189, %192 : vector<1x128xf32>
    %cst_57 = arith.constant 0.000000e+00 : f32
    %194 = arith.cmpf olt, %cst_54, %cst_57 : f32
    %195 = vector.broadcast %194 : i1 to vector<1x128xi1>
    %196 = vector.broadcast %195 : vector<1x128xi1> to vector<1x128xi1>
    %197 = arith.xori %193, %196 : vector<1x128xi1>
    %198 = arith.andi %197, %191 : vector<1x128xi1>
    %199 = vector.broadcast %cst_54 : f32 to vector<1x128xf32>
    %200 = arith.addf %189, %199 : vector<1x128xf32>
    %201 = arith.select %198, %200, %189 : vector<1x128xi1>, vector<1x128xf32>
    %202 = arith.subf %201, %10 : vector<1x128xf32>
    %203 = math.cos %10 : vector<1x128xf32>
    %204 = math.sin %10 : vector<1x128xf32>
    %205 = arith.mulf %185, %203 : vector<1x128xf32>
    %206 = arith.mulf %186, %204 : vector<1x128xf32>
    %207 = arith.addf %205, %206 : vector<1x128xf32>
    %cst_58 = arith.constant 0.000000e+00 : f32
    %208 = vector.broadcast %cst_58 : f32 to vector<1x128xf32>
    %209 = arith.subf %208, %185 : vector<1x128xf32>
    %210 = arith.mulf %209, %204 : vector<1x128xf32>
    %211 = arith.mulf %186, %203 : vector<1x128xf32>
    %212 = arith.addf %210, %211 : vector<1x128xf32>
    %cst_59 = arith.constant 6.28318548 : f32
    %213 = vector.broadcast %cst_59 : f32 to vector<1x128xf32>
    %214 = arith.remf %202, %213 : vector<1x128xf32>
    %cst_60 = arith.constant 0.000000e+00 : f32
    %215 = vector.broadcast %cst_60 : f32 to vector<1x128xf32>
    %216 = arith.cmpf one, %214, %215 : vector<1x128xf32>
    %cst_61 = arith.constant 0.000000e+00 : f32
    %217 = vector.broadcast %cst_61 : f32 to vector<1x128xf32>
    %218 = arith.cmpf olt, %214, %217 : vector<1x128xf32>
    %cst_62 = arith.constant 0.000000e+00 : f32
    %219 = arith.cmpf olt, %cst_59, %cst_62 : f32
    %220 = vector.broadcast %219 : i1 to vector<1x128xi1>
    %221 = vector.broadcast %220 : vector<1x128xi1> to vector<1x128xi1>
    %222 = arith.xori %218, %221 : vector<1x128xi1>
    %223 = arith.andi %222, %216 : vector<1x128xi1>
    %224 = vector.broadcast %cst_59 : f32 to vector<1x128xf32>
    %225 = arith.addf %214, %224 : vector<1x128xf32>
    %226 = arith.select %223, %225, %214 : vector<1x128xi1>, vector<1x128xf32>
    %cst_63 = arith.constant 1.57079637 : f32
    %227 = vector.broadcast %cst_63 : f32 to vector<1x128xf32>
    %228 = arith.cmpf ogt, %226, %227 : vector<1x128xf32>
    %cst_64 = arith.constant 4.71238899 : f32
    %229 = vector.broadcast %cst_64 : f32 to vector<1x128xf32>
    %230 = arith.cmpf olt, %226, %229 : vector<1x128xf32>
    %231 = arith.andi %228, %230 : vector<1x128xi1>
    %cst_65 = arith.constant 3.14159274 : f32
    %232 = vector.broadcast %cst_65 : f32 to vector<1x128xf32>
    %233 = arith.subf %226, %232 : vector<1x128xf32>
    %cst_66 = arith.constant 6.28318548 : f32
    %234 = vector.broadcast %cst_66 : f32 to vector<1x128xf32>
    %235 = arith.remf %233, %234 : vector<1x128xf32>
    %cst_67 = arith.constant 0.000000e+00 : f32
    %236 = vector.broadcast %cst_67 : f32 to vector<1x128xf32>
    %237 = arith.cmpf one, %235, %236 : vector<1x128xf32>
    %cst_68 = arith.constant 0.000000e+00 : f32
    %238 = vector.broadcast %cst_68 : f32 to vector<1x128xf32>
    %239 = arith.cmpf olt, %235, %238 : vector<1x128xf32>
    %cst_69 = arith.constant 0.000000e+00 : f32
    %240 = arith.cmpf olt, %cst_66, %cst_69 : f32
    %241 = vector.broadcast %240 : i1 to vector<1x128xi1>
    %242 = vector.broadcast %241 : vector<1x128xi1> to vector<1x128xi1>
    %243 = arith.xori %239, %242 : vector<1x128xi1>
    %244 = arith.andi %243, %237 : vector<1x128xi1>
    %245 = vector.broadcast %cst_66 : f32 to vector<1x128xf32>
    %246 = arith.addf %235, %245 : vector<1x128xf32>
    %247 = arith.select %244, %246, %235 : vector<1x128xi1>, vector<1x128xf32>
    %248 = arith.select %231, %247, %226 : vector<1x128xi1>, vector<1x128xf32>
    %cst_70 = arith.constant 3.14159274 : f32
    %249 = vector.broadcast %cst_70 : f32 to vector<1x128xf32>
    %250 = arith.cmpf ogt, %248, %249 : vector<1x128xf32>
    %cst_71 = arith.constant 6.28318548 : f32
    %251 = vector.broadcast %cst_71 : f32 to vector<1x128xf32>
    %252 = arith.subf %248, %251 : vector<1x128xf32>
    %253 = arith.select %250, %252, %248 : vector<1x128xi1>, vector<1x128xf32>
    %cst_72 = arith.constant -1.57079637 : f32
    %cst_73 = arith.constant 1.57079637 : f32
    %254 = vector.broadcast %cst_72 : f32 to vector<1x128xf32>
    %255 = arith.maximumf %254, %253 : vector<1x128xf32>
    %256 = vector.broadcast %cst_73 : f32 to vector<1x128xf32>
    %257 = arith.minimumf %256, %255 : vector<1x128xf32>
    %258 = tpu.concatenate %207, %212, %187, %143, %147, %151, %257, %159 in 0 : vector<1x128xf32>, vector<1x128xf32>, vector<1x128xf32>, vector<1x128xf32>, vector<1x128xf32>, vector<1x128xf32>, vector<1x128xf32>, vector<1x128xf32> -> vector<8x128xf32>
    %c0_74 = arith.constant 0 : index
    %c0_75 = arith.constant 0 : index
    %c0_76 = arith.constant 0 : index
    %259 = vector.load %arg7[%c0_74, %c0_75, %c0_76] : memref<1x8x128xf32, #tpu.memory_space<vmem>>, vector<1x8x128xf32>
    %260 = vector.shape_cast %259 : vector<1x8x128xf32> to vector<8x128xf32>
    %261 = vector.shape_cast %258 : vector<8x128xf32> to vector<1x8x128xf32>
    tpu.vector_store %arg7[%c0_74, %c0_75, %c0_76], %261 {strides = array<i32>} : memref<1x8x128xf32, #tpu.memory_space<vmem>>, vector<1x8x128xf32>,
    %cst_77 = arith.constant 9.99999974E-6 : f32
    %262 = vector.broadcast %cst_77 : f32 to vector<1x128xf32>
    %263 = arith.maximumf %7, %262 : vector<1x128xf32>
    %cst_78 = arith.constant 9.99999974E-6 : f32
    %264 = vector.broadcast %cst_78 : f32 to vector<1x128xf32>
    %265 = arith.maximumf %8, %264 : vector<1x128xf32>
    %cst_79 = arith.constant 9.99999974E-6 : f32
    %266 = vector.broadcast %cst_79 : f32 to vector<1x128xf32>
    %267 = arith.maximumf %9, %266 : vector<1x128xf32>
    %cst_80 = arith.constant 9.99999974E-6 : f32
    %268 = vector.broadcast %cst_80 : f32 to vector<1x128xf32>
    %269 = arith.maximumf %143, %268 : vector<1x128xf32>
    %cst_81 = arith.constant 9.99999974E-6 : f32
    %270 = vector.broadcast %cst_81 : f32 to vector<1x128xf32>
    %271 = arith.maximumf %147, %270 : vector<1x128xf32>
    %cst_82 = arith.constant 9.99999974E-6 : f32
    %272 = vector.broadcast %cst_82 : f32 to vector<1x128xf32>
    %273 = arith.maximumf %151, %272 : vector<1x128xf32>
    %274 = arith.mulf %263, %263 : vector<1x128xf32>
    %275 = arith.mulf %265, %265 : vector<1x128xf32>
    %276 = arith.addf %274, %275 : vector<1x128xf32>
    %277 = math.sqrt %276 : vector<1x128xf32>
    %cst_83 = arith.constant 1.000000e+00 : f32
    %278 = vector.broadcast %cst_83 : f32 to vector<1x128xf32>
    %279 = arith.divf %278, %277 : vector<1x128xf32>
    %280 = arith.mulf %207, %279 : vector<1x128xf32>
    %281 = arith.mulf %212, %279 : vector<1x128xf32>
    %282 = arith.divf %187, %267 : vector<1x128xf32>
    %283 = arith.divf %269, %263 : vector<1x128xf32>
    %284 = math.log %283 : vector<1x128xf32>
    %285 = arith.divf %271, %265 : vector<1x128xf32>
    %286 = math.log %285 : vector<1x128xf32>
    %287 = arith.divf %273, %267 : vector<1x128xf32>
    %288 = math.log %287 : vector<1x128xf32>
    %cst_84 = arith.constant 0.000000e+00 : f32
    %289 = vector.broadcast %cst_84 : f32 to vector<1x128xf32>
    %290 = tpu.concatenate %280, %281, %282, %284, %286, %288, %257, %289 in 0 : vector<1x128xf32>, vector<1x128xf32>, vector<1x128xf32>, vector<1x128xf32>, vector<1x128xf32>, vector<1x128xf32>, vector<1x128xf32>, vector<1x128xf32> -> vector<8x128xf32>
    %c0_85 = arith.constant 0 : index
    %c0_86 = arith.constant 0 : index
    %c0_87 = arith.constant 0 : index
    %291 = vector.load %arg8[%c0_85, %c0_86, %c0_87] : memref<1x8x128xf32, #tpu.memory_space<vmem>>, vector<1x8x128xf32>
    %292 = vector.shape_cast %291 : vector<1x8x128xf32> to vector<8x128xf32>
    %293 = vector.shape_cast %290 : vector<8x128xf32> to vector<1x8x128xf32>
    tpu.vector_store %arg8[%c0_85, %c0_86, %c0_87], %293 {strides = array<i32>} : memref<1x8x128xf32, #tpu.memory_space<vmem>>, vector<1x8x128xf32>,
    return
  }
  func.func @transform_0(%arg0: i32) -> (i32, i32, i32) {
    %c0_i32 = arith.constant 0 : i32
    %c0_i32_0 = arith.constant 0 : i32
    %c0_i32_1 = arith.constant 0 : i32
    return %arg0, %c0_i32, %c0_i32_0 : i32, i32, i32
  }
  func.func @transform_1(%arg0: i32) -> (i32, i32, i32) {
    %c0_i32 = arith.constant 0 : i32
    %c0_i32_0 = arith.constant 0 : i32
    %c0_i32_1 = arith.constant 0 : i32
    return %arg0, %c0_i32, %c0_i32_0 : i32, i32, i32
  }
  func.func @transform_2(%arg0: i32) -> (i32, i32, i32) {
    %c0_i32 = arith.constant 0 : i32
    %c0_i32_0 = arith.constant 0 : i32
    %c0_i32_1 = arith.constant 0 : i32
    return %arg0, %c0_i32, %c0_i32_0 : i32, i32, i32
  }
  func.func @transform_3(%arg0: i32) -> (i32, i32, i32) {
    %c0_i32 = arith.constant 0 : i32
    %c0_i32_0 = arith.constant 0 : i32
    %c0_i32_1 = arith.constant 0 : i32
    return %arg0, %c0_i32, %c0_i32_0 : i32, i32, i32
  }
  func.func @transform_4(%arg0: i32) -> (i32, i32, i32) {
    %c0_i32 = arith.constant 0 : i32
    %c0_i32_0 = arith.constant 0 : i32
    %c0_i32_1 = arith.constant 0 : i32
    return %arg0, %c0_i32, %c0_i32_0 : i32, i32, i32
  }
  func.func @transform_5(%arg0: i32) -> (i32, i32, i32) {
    %c0_i32 = arith.constant 0 : i32
    %c0_i32_0 = arith.constant 0 : i32
    %c0_i32_1 = arith.constant 0 : i32
    return %arg0, %c0_i32, %c0_i32_0 : i32, i32, i32
  }
  func.func @transform_6(%arg0: i32) -> (i32, i32, i32) {
    %c0_i32 = arith.constant 0 : i32
    %c0_i32_0 = arith.constant 0 : i32
    %c0_i32_1 = arith.constant 0 : i32
    return %arg0, %c0_i32, %c0_i32_0 : i32, i32, i32
  }
  func.func @transform_7(%arg0: i32) -> (i32, i32, i32) {
    %c0_i32 = arith.constant 0 : i32
    %c0_i32_0 = arith.constant 0 : i32
    %c0_i32_1 = arith.constant 0 : i32
    return %arg0, %c0_i32, %c0_i32_0 : i32, i32, i32
  }
}

</mosaic_0001>

<llo_original>
// kernel: tpu_custom_call.1
$region0: #{tpu_custom_call.1}
  #allocation0 [shape = 'u32[]', space=smem, size = 0x4, offset = 0x4, fixed_abs, tag = 'smem constant byte address 0x4 - core index']
  #allocation1 [shape = 'u32[72,128]{1,0:T(1,128)}', space=vmem, size = 0x9000, scoped, tag = 'internal scratch']
  %s0 = inlined_call_operand.vmem [shape: f32[2,8,128], index: 0, kind: input, shape index: {}]
  %s1 = inlined_call_operand.vmem [shape: f32[2,16,8], index: 1, kind: input, shape index: {}]
  %s2 = inlined_call_operand.hbm [shape: f32[2,1,128], index: 2, kind: output, shape index: {0}]
  %s3 = inlined_call_operand.hbm [shape: f32[2,8,128], index: 3, kind: output, shape index: {1}]
  %s4 = inlined_call_operand.hbm [shape: f32[2,1,128], index: 4, kind: output, shape index: {2}]
  %s5 = inlined_call_operand.hbm [shape: s32[2,1,128], index: 5, kind: output, shape index: {3}]
  %s6 = inlined_call_operand.hbm [shape: f32[2,8,128], index: 6, kind: output, shape index: {4}]
  %s7 = inlined_call_operand.hbm [shape: f32[2,8,128], index: 7, kind: output, shape index: {5}]
  %8 = xla_tuple %s2, %s3, %s4, %s5, %s6, %s7
  %s9 = sld [smem:[#allocation0]]
  $region81: #{tpu_custom_call.1} parent=0
    _
  %s11 = ssub.s32 1, %s9
  %s12 = scalar_select 0, %s11, %s9
  $region1: #{tpu_custom_call.1} parent=0
    #allocation2 [shape = 'u8[1024]{0}', space=vmem, size = 0x400, scoped, tag = 'output window, operand 0']
    #allocation3 [shape = 's32[2]{0}', space=sflag, size = 0x8, scoped, tag = 'scoped memory for tpu_custom_call.1']
    #allocation4 [shape = 'u8[8192]{0}', space=vmem, size = 0x2000, scoped, tag = 'output window, operand 1']
    #allocation5 [shape = 's32[2]{0}', space=sflag, size = 0x8, scoped, tag = 'scoped memory for tpu_custom_call.1']
    #allocation6 [shape = 'u8[1024]{0}', space=vmem, size = 0x400, scoped, tag = 'output window, operand 2']
    #allocation7 [shape = 'u8[1024]{0}', space=vmem, size = 0x400, scoped, tag = 'output window, operand 3']
    #allocation8 [shape = 's32[2]{0}', space=sflag, size = 0x8, scoped, tag = 'scoped memory for tpu_custom_call.1']
    #allocation9 [shape = 'u8[8192]{0}', space=vmem, size = 0x2000, scoped, tag = 'output window, operand 4']
    #allocation10 [shape = 'u8[8192]{0}', space=vmem, size = 0x2000, scoped, tag = 'output window, operand 5']
    #allocation11 [shape = 's32[2]{0}', space=sflag, size = 0x8, scoped, tag = 'scoped memory for tpu_custom_call.1']
    %13 = vsyncpa [#allocation3], 0
    %s14 = scalar_lea.sflag [#allocation3], 1
    %15 = vsyncpa %s14, 0
    %16 = vsyncpa [#allocation5], 0
    %s17 = scalar_lea.sflag [#allocation5], 1
    %18 = vsyncpa %s17, 0
    %19 = vsyncpa [#allocation8], 0
    %s20 = scalar_lea.sflag [#allocation8], 1
    %21 = vsyncpa %s20, 0
    %22 = vsyncpa [#allocation11], 0
    %s23 = scalar_lea.sflag [#allocation11], 1
    %24 = vsyncpa %s23, 0
    loop: start=0, step=1, limit=4
    $region2: #{tpu_custom_call.1} parent=1 // loop_pre_header
      _
    $region3: #{tpu_custom_call.1} parent=1 // loop_header
      %s26 = sphi 0, %s30
      %p27 = scmp.ge.s32.totalorder %s26, 4
      %s36 = sphi 0, %s38
      %s39 = sphi 0, %s36
      %s40 = sphi 0, %s39
      %s56 = sphi 0, %s40
      %s62 = sphi 0, %s64
      %s65 = sphi 0, %s62
      %s66 = sphi 0, %s65
      %s82 = sphi 0, %s66
      %s88 = sphi 0, %s90
      %s91 = sphi 0, %s88
      %s92 = sphi 0, %s91
      %s108 = sphi 0, %s92
      %s114 = sphi 0, %s116
      %s117 = sphi 0, %s114
      %s118 = sphi 0, %s117
      %s134 = sphi 0, %s118
      %s140 = sphi 0, %s142
      %s143 = sphi 0, %s140
      %s144 = sphi 0, %s143
      %s160 = sphi 0, %s144
      %s166 = sphi 0, %s168
      %s169 = sphi 0, %s166
      %s170 = sphi 0, %s169
      %s186 = sphi 0, %s170
      %s192 = sphi 0, %s194
      %s195 = sphi 0, %s192
      %s196 = sphi 0, %s195
      %s212 = sphi 0, %s196
      %s218 = sphi 0, %s220
      %s221 = sphi 0, %s218
      %s222 = sphi 0, %s221
      %s238 = sphi 0, %s222
    $region4: #{tpu_custom_call.1} parent=1 // loop_header_branch
      %29 = sbr.rel (%p27) target = $region8
    $region5: #{tpu_custom_call.1} parent=1 // loop_body
      %s31 = ssub.s32 %s26, 1
      %s32 = ssub.s32 %s26, 2
      %s33 = sadd.s32 %s26, 1
      %s34 = ssub.s32 %s26, %s33
      %p35 = scmp.eq.s32.totalorder %s34, 0
      %s37 = sadd.s32 %s36, 1
      %s38 = scalar_select %p35, %s36, %s37
      %p41 = pneg %p35
      %p42 = scmp.eq.s32.totalorder %s26, 1
      %p43 = por %p41, %p42
      %p44 = scmp.ne.s32.totalorder %s36, %s39
      %p45 = scmp.eq.s32.totalorder %s26, 0
      %p46 = por %p44, %p45
      %p47 = scmp.ne.s32.totalorder %s36, %s39
      %p48 = scmp.eq.s32.totalorder %s31, 1
      %p49 = por %p47, %p48
      %p50 = scmp.ne.s32.totalorder %s39, %s40
      %p51 = scmp.eq.s32.totalorder %s31, 0
      %p52 = por %p50, %p51
      %p53 = scmp.ne.s32.totalorder %s39, %s40
      %p54 = scmp.eq.s32.totalorder %s32, 1
      %p55 = por %p53, %p54
      %p57 = scmp.ne.s32.totalorder %s40, %s56
      %p58 = scmp.eq.s32.totalorder %s32, 0
      %p59 = por %p57, %p58
      %s60 = ssub.s32 %s26, %s33
      %p61 = scmp.eq.s32.totalorder %s60, 0
      %s63 = sadd.s32 %s62, 1
      %s64 = scalar_select %p61, %s62, %s63
      %p67 = pneg %p61
      %p68 = scmp.eq.s32.totalorder %s26, 1
      %p69 = por %p67, %p68
      %p70 = scmp.ne.s32.totalorder %s62, %s65
      %p71 = scmp.eq.s32.totalorder %s26, 0
      %p72 = por %p70, %p71
      %p73 = scmp.ne.s32.totalorder %s62, %s65
      %p74 = scmp.eq.s32.totalorder %s31, 1
      %p75 = por %p73, %p74
      %p76 = scmp.ne.s32.totalorder %s65, %s66
      %p77 = scmp.eq.s32.totalorder %s31, 0
      %p78 = por %p76, %p77
      %p79 = scmp.ne.s32.totalorder %s65, %s66
      %p80 = scmp.eq.s32.totalorder %s32, 1
      %p81 = por %p79, %p80
      %p83 = scmp.ne.s32.totalorder %s66, %s82
      %p84 = scmp.eq.s32.totalorder %s32, 0
      %p85 = por %p83, %p84
      %s86 = ssub.s32 %s26, %s33
      %p87 = scmp.eq.s32.totalorder %s86, 0
      %s89 = sadd.s32 %s88, 1
      %s90 = scalar_select %p87, %s88, %s89
      %p93 = pneg %p87
      %p94 = scmp.eq.s32.totalorder %s26, 1
      %p95 = por %p93, %p94
      %p96 = scmp.ne.s32.totalorder %s88, %s91
      %p97 = scmp.eq.s32.totalorder %s26, 0
      %p98 = por %p96, %p97
      %p99 = scmp.ne.s32.totalorder %s88, %s91
      %p100 = scmp.eq.s32.totalorder %s31, 1
      %p101 = por %p99, %p100
      %p102 = scmp.ne.s32.totalorder %s91, %s92
      %p103 = scmp.eq.s32.totalorder %s31, 0
      %p104 = por %p102, %p103
      %p105 = scmp.ne.s32.totalorder %s91, %s92
      %p106 = scmp.eq.s32.totalorder %s32, 1
      %p107 = por %p105, %p106
      %p109 = scmp.ne.s32.totalorder %s92, %s108
      %p110 = scmp.eq.s32.totalorder %s32, 0
      %p111 = por %p109, %p110
      %s112 = ssub.s32 %s26, %s33
      %p113 = scmp.eq.s32.totalorder %s112, 0
      %s115 = sadd.s32 %s114, 1
      %s116 = scalar_select %p113, %s114, %s115
      %p119 = pneg %p113
      %p120 = scmp.eq.s32.totalorder %s26, 1
      %p121 = por %p119, %p120
      %p122 = scmp.ne.s32.totalorder %s114, %s117
      %p123 = scmp.eq.s32.totalorder %s26, 0
      %p124 = por %p122, %p123
      %p125 = scmp.ne.s32.totalorder %s114, %s117
      %p126 = scmp.eq.s32.totalorder %s31, 1
      %p127 = por %p125, %p126
      %p128 = scmp.ne.s32.totalorder %s117, %s118
      %p129 = scmp.eq.s32.totalorder %s31, 0
      %p130 = por %p128, %p129
      %p131 = scmp.ne.s32.totalorder %s117, %s118
      %p132 = scmp.eq.s32.totalorder %s32, 1
      %p133 = por %p131, %p132
      %p135 = scmp.ne.s32.totalorder %s118, %s134
      %p136 = scmp.eq.s32.totalorder %s32, 0
      %p137 = por %p135, %p136
      %s138 = ssub.s32 %s26, %s33
      %p139 = scmp.eq.s32.totalorder %s138, 0
      %s141 = sadd.s32 %s140, 1
      %s142 = scalar_select %p139, %s140, %s141
      %p145 = pneg %p139
      %p146 = scmp.eq.s32.totalorder %s26, 1
      %p147 = por %p145, %p146
      %p148 = scmp.ne.s32.totalorder %s140, %s143
      %p149 = scmp.eq.s32.totalorder %s26, 0
      %p150 = por %p148, %p149
      %p151 = scmp.ne.s32.totalorder %s140, %s143
      %p152 = scmp.eq.s32.totalorder %s31, 1
      %p153 = por %p151, %p152
      %p154 = scmp.ne.s32.totalorder %s143, %s144
      %p155 = scmp.eq.s32.totalorder %s31, 0
      %p156 = por %p154, %p155
      %p157 = scmp.ne.s32.totalorder %s143, %s144
      %p158 = scmp.eq.s32.totalorder %s32, 1
      %p159 = por %p157, %p158
      %p161 = scmp.ne.s32.totalorder %s144, %s160
      %p162 = scmp.eq.s32.totalorder %s32, 0
      %p163 = por %p161, %p162
      %s164 = ssub.s32 %s26, %s33
      %p165 = scmp.eq.s32.totalorder %s164, 0
      %s167 = sadd.s32 %s166, 1
      %s168 = scalar_select %p165, %s166, %s167
      %p171 = pneg %p165
      %p172 = scmp.eq.s32.totalorder %s26, 1
      %p173 = por %p171, %p172
      %p174 = scmp.ne.s32.totalorder %s166, %s169
      %p175 = scmp.eq.s32.totalorder %s26, 0
      %p176 = por %p174, %p175
      %p177 = scmp.ne.s32.totalorder %s166, %s169
      %p178 = scmp.eq.s32.totalorder %s31, 1
      %p179 = por %p177, %p178
      %p180 = scmp.ne.s32.totalorder %s169, %s170
      %p181 = scmp.eq.s32.totalorder %s31, 0
      %p182 = por %p180, %p181
      %p183 = scmp.ne.s32.totalorder %s169, %s170
      %p184 = scmp.eq.s32.totalorder %s32, 1
      %p185 = por %p183, %p184
      %p187 = scmp.ne.s32.totalorder %s170, %s186
      %p188 = scmp.eq.s32.totalorder %s32, 0
      %p189 = por %p187, %p188
      %s190 = ssub.s32 %s26, %s33
      %p191 = scmp.eq.s32.totalorder %s190, 0
      %s193 = sadd.s32 %s192, 1
      %s194 = scalar_select %p191, %s192, %s193
      %p197 = pneg %p191
      %p198 = scmp.eq.s32.totalorder %s26, 1
      %p199 = por %p197, %p198
      %p200 = scmp.ne.s32.totalorder %s192, %s195
      %p201 = scmp.eq.s32.totalorder %s26, 0
      %p202 = por %p200, %p201
      %p203 = scmp.ne.s32.totalorder %s192, %s195
      %p204 = scmp.eq.s32.totalorder %s31, 1
      %p205 = por %p203, %p204
      %p206 = scmp.ne.s32.totalorder %s195, %s196
      %p207 = scmp.eq.s32.totalorder %s31, 0
      %p208 = por %p206, %p207
      %p209 = scmp.ne.s32.totalorder %s195, %s196
      %p210 = scmp.eq.s32.totalorder %s32, 1
      %p211 = por %p209, %p210
      %p213 = scmp.ne.s32.totalorder %s196, %s212
      %p214 = scmp.eq.s32.totalorder %s32, 0
      %p215 = por %p213, %p214
      %s216 = ssub.s32 %s26, %s33
      %p217 = scmp.eq.s32.totalorder %s216, 0
      %s219 = sadd.s32 %s218, 1
      %s220 = scalar_select %p217, %s218, %s219
      %p223 = pneg %p217
      %p224 = scmp.eq.s32.totalorder %s26, 1
      %p225 = por %p223, %p224
      %p226 = scmp.ne.s32.totalorder %s218, %s221
      %p227 = scmp.eq.s32.totalorder %s26, 0
      %p228 = por %p226, %p227
      %p229 = scmp.ne.s32.totalorder %s218, %s221
      %p230 = scmp.eq.s32.totalorder %s31, 1
      %p231 = por %p229, %p230
      %p232 = scmp.ne.s32.totalorder %s221, %s222
      %p233 = scmp.eq.s32.totalorder %s31, 0
      %p234 = por %p232, %p233
      %p235 = scmp.ne.s32.totalorder %s221, %s222
      %p236 = scmp.eq.s32.totalorder %s32, 1
      %p237 = por %p235, %p236
      %p239 = scmp.ne.s32.totalorder %s222, %s238
      %p240 = scmp.eq.s32.totalorder %s32, 0
      %p241 = por %p239, %p240
      %p242 = scmp.le.s32.totalorder 1, %s26
      %p243 = scmp.lt.s32.totalorder %s26, 3
      %p244 = pnand %p242, %p243
      %p245 = pneg %p244
      // Predicated region
      $region9: #{tpu_custom_call.1} parent=5 // pred_check
        _
      $region10: #{tpu_custom_call.1} parent=5 // pred_check_branch
        %247 = sbr.rel (%p244) target = $region12
      $region11: #{tpu_custom_call.1} parent=5 // pred_region
        %s248 = ssub.s32 %s26, 1
      $region12: #{tpu_custom_call.1} parent=5 // pred_fallthru
        _
      %p249 = scmp.lt.s32.totalorder %s26, 2
      // Predicated region
      $region13: #{tpu_custom_call.1} parent=5 // pred_check
        %p250 = pneg %p249
      $region14: #{tpu_custom_call.1} parent=5 // pred_check_branch
        %252 = sbr.rel (%p250) target = $region16
      $region15: #{tpu_custom_call.1} parent=5 // pred_region
        // Predicated region
        $region17: #{tpu_custom_call.1} parent=15 // pred_check
          %p253 = pneg %p46
        $region18: #{tpu_custom_call.1} parent=15 // pred_check_branch
          %255 = sbr.rel (%p253) target = $region20
        $region19: #{tpu_custom_call.1} parent=15 // pred_region
          %p256 = scmp.lt.s32.totalorder %s26, 1
          %s257 = scalar_select %p256, %s26, 1
          %s258 = smul.addr %s257, 8
          %s259 = scalar_lea.vmem %s0, %s258
        $region20: #{tpu_custom_call.1} parent=15 // pred_fallthru
          _
        // Predicated region
        $region21: #{tpu_custom_call.1} parent=15 // pred_check
          %p260 = pneg %p72
        $region22: #{tpu_custom_call.1} parent=15 // pred_check_branch
          %262 = sbr.rel (%p260) target = $region24
        $region23: #{tpu_custom_call.1} parent=15 // pred_region
          %p263 = scmp.lt.s32.totalorder %s26, 1
          %s264 = scalar_select %p263, %s26, 1
          %s265 = smul.addr %s264, 2
          %s266 = smul.addr %s265, 8
          %s267 = scalar_lea.vmem %s1, %s266
        $region24: #{tpu_custom_call.1} parent=15 // pred_fallthru
          _
      $region16: #{tpu_custom_call.1} parent=5 // pred_fallthru
        _
      %p268 = scmp.le.s32.totalorder 1, %s26
      %p269 = scmp.lt.s32.totalorder %s26, 3
      %p270 = pnand %p268, %p269
      %p271 = pneg %p270
      // Predicated region
      $region25: #{tpu_custom_call.1} parent=5 // pred_check
        _
      $region26: #{tpu_custom_call.1} parent=5 // pred_check_branch
        %273 = sbr.rel (%p270) target = $region28
      $region27: #{tpu_custom_call.1} parent=5 // pred_region
        %s274 = ssub.s32 %s26, 1
        %p275 = scmp.lt.s32.totalorder %s31, 1
        %s276 = scalar_select %p275, %s31, 1
        %s277 = smul.addr %s276, 8
        %s278 = scalar_lea.vmem %s0, %s277
        %p279 = pneg %p52
        %p280 = pneg %p49
        %p281 = scmp.lt.s32.totalorder %s31, 1
        %s282 = scalar_select %p281, %s31, 1
        %s283 = smul.addr %s282, 2
        %s284 = smul.addr %s283, 8
        %s285 = scalar_lea.vmem %s1, %s284
        %p286 = pneg %p78
        %p287 = pneg %p75
        %p288 = pneg %p104
        %p289 = pneg %p101
        %s290 = sand.u32 %s91, 1
        %s291 = scalar_lea.sflag [#allocation3], %s290
        %s292 = sand.u32 %s91, 1
        %s293 = scalar_lea.vmem [#allocation2], %s292
        %p294 = pneg %p130
        %p295 = pneg %p127
        %s296 = sand.u32 %s31, 1
        %s297 = scalar_lea.sflag [#allocation5], %s296
        %s298 = sand.u32 %s117, 1
        %s299 = smul.addr %s298, 8
        %s300 = scalar_lea.vmem [#allocation4], %s299
        %p301 = pneg %p156
        %p302 = pneg %p153
        %s303 = sand.u32 %s31, 1
        %s304 = scalar_lea.sflag [#allocation5], %s303
        %s305 = sand.u32 %s143, 1
        %s306 = scalar_lea.vmem [#allocation6], %s305
        %p307 = pneg %p182
        %p308 = pneg %p179
        %s309 = sand.u32 %s31, 1
        %s310 = scalar_lea.sflag [#allocation8], %s309
        %s311 = sand.u32 %s169, 1
        %s312 = scalar_lea.vmem [#allocation7], %s311
        %p313 = pneg %p208
        %p314 = pneg %p205
        %s315 = sand.u32 %s31, 1
        %s316 = scalar_lea.sflag [#allocation8], %s315
        %s317 = sand.u32 %s195, 1
        %s318 = smul.addr %s317, 8
        %s319 = scalar_lea.vmem [#allocation9], %s318
        %p320 = pneg %p234
        %p321 = pneg %p231
        %s322 = sand.u32 %s221, 1
        %s323 = scalar_lea.sflag [#allocation11], %s322
        %s324 = sand.u32 %s221, 1
        %s325 = smul.addr %s324, 8
        %s326 = scalar_lea.vmem [#allocation10], %s325
        %p327 = scmp.lt.s32.totalorder %s31, 1
        %s328 = scalar_select %p327, %s31, 1
        %s329 = smul.addr %s328, 8
        %s330 = scalar_lea.vmem %s0, %s329
        %p331 = scmp.lt.s32.totalorder %s31, 1
        %s332 = scalar_select %p331, %s31, 1
        %s333 = smul.addr %s332, 2
        %s334 = smul.addr %s333, 8
        %s335 = scalar_lea.vmem %s1, %s334
        %v336 = vld [vmem:[%s330] sm:$0xff]
        %v337 = vld [vmem:[%s335] sm:$0xff]
        %v338 = vld [vmem:[%s335 + $0x8] sm:$0xff]
        %v339 = vand.u32 2147483647, %v337
        %v340 = vand.u32 2147483647, %v338
        %vm341 = vcmask 64512
        %v342 = vsel %vm341, %v339, 0.0
        %343 = vadd.xlane.f32.xlu0 %v342
        %v344 = vpop.xlane.xlu0 %343
        %v345 = vsel %vm341, %v340, 0.0
        %346 = vadd.xlane.f32.xlu0 %v345
        %v347 = vpop.xlane.xlu0 %346
        %vm348 = vcmp.gt.f32.partialorder %v344, 0.0
        %vm349 = vcmp.gt.f32.partialorder %v347, 0.0
        %v350 = vmul.f32 %v336, 0.5
        %v352 = vrot.slane %v350, 3
        %v354 = vadd.f32 %v336, %v352
        %v355 = vmul.f32 %v337, 0.5
        %v356 = vmul.f32 %v338, 0.5
        %359 = vrot.lane.b32.xlu0 %v355, 125
        %v360 = vpop.permute.xlu0 %359
        %361 = vrot.lane.b32.xlu0 %v356, 125
        %v362 = vpop.permute.xlu0 %361
        %v365 = vadd.f32 %v337, %v360
        %v366 = vadd.f32 %v338, %v362
        %v367 = vperm.slane %v354, 0
        %369 = vset.pattern.permute.xlu0 0
        %370 = vperm.xlu0 %369, %v365
        %v371 = vpop.permute.xlu0 %370
        %374 = vset.pattern.permute.xlu0 0
        %375 = vperm.xlu0 %374, %v366
        %v376 = vpop.permute.xlu0 %375
        %v378 = vmin.f32 %v367, %v371
        %v379 = vmin.f32 %v367, %v376
        %v380 = vsub.f32 %v336, %v352
        %v381 = vsub.f32 %v337, %v360
        %v382 = vsub.f32 %v338, %v362
        %v383 = vperm.slane %v380, 0
        %385 = vset.pattern.permute.xlu0 0
        %386 = vperm.xlu0 %385, %v381
        %v387 = vpop.permute.xlu0 %386
        %390 = vset.pattern.permute.xlu0 0
        %391 = vperm.xlu0 %390, %v382
        %v392 = vpop.permute.xlu0 %391
        %v394 = vmax.f32 %v383, %v387
        %v395 = vmax.f32 %v383, %v392
        %v396 = vsub.f32 %v378, %v394
        %v397 = vsub.f32 %v379, %v395
        %v398 = vmax.f32 %v396, 0.0
        %v399 = vmax.f32 %v397, 0.0
        %v400 = vperm.slane %v354, 1
        %401 = vset.pattern.permute.xlu0 1
        %402 = vperm.xlu0 %401, %v365
        %v403 = vpop.permute.xlu0 %402
        %405 = vset.pattern.permute.xlu0 1
        %406 = vperm.xlu0 %405, %v366
        %v407 = vpop.permute.xlu0 %406
        %v409 = vmin.f32 %v400, %v403
        %v410 = vmin.f32 %v400, %v407
        %v411 = vperm.slane %v380, 1
        %412 = vset.pattern.permute.xlu0 1
        %413 = vperm.xlu0 %412, %v381
        %v414 = vpop.permute.xlu0 %413
        %416 = vset.pattern.permute.xlu0 1
        %417 = vperm.xlu0 %416, %v382
        %v418 = vpop.permute.xlu0 %417
        %v420 = vmax.f32 %v411, %v414
        %v421 = vmax.f32 %v411, %v418
        %v422 = vsub.f32 %v409, %v420
        %v423 = vsub.f32 %v410, %v421
        %v424 = vmax.f32 %v422, 0.0
        %v425 = vmax.f32 %v423, 0.0
        %v426 = vperm.slane %v354, 2
        %427 = vset.pattern.permute.xlu0 2
        %428 = vperm.xlu0 %427, %v365
        %v429 = vpop.permute.xlu0 %428
        %431 = vset.pattern.permute.xlu0 2
        %432 = vperm.xlu0 %431, %v366
        %v433 = vpop.permute.xlu0 %432
        %v435 = vmin.f32 %v426, %v429
        %v436 = vmin.f32 %v426, %v433
        %v437 = vperm.slane %v380, 2
        %438 = vset.pattern.permute.xlu0 2
        %439 = vperm.xlu0 %438, %v381
        %v440 = vpop.permute.xlu0 %439
        %442 = vset.pattern.permute.xlu0 2
        %443 = vperm.xlu0 %442, %v382
        %v444 = vpop.permute.xlu0 %443
        %v446 = vmax.f32 %v437, %v440
        %v447 = vmax.f32 %v437, %v444
        %v448 = vsub.f32 %v435, %v446
        %v449 = vsub.f32 %v436, %v447
        %v450 = vmax.f32 %v448, 0.0
        %v451 = vmax.f32 %v449, 0.0
        %v452 = vmul.f32 %v398, %v424
        %v453 = vmul.f32 %v399, %v425
        %v454 = vmul.f32 %v452, %v450
        %v455 = vmul.f32 %v453, %v451
        %v457 = vrot.slane %v336, 1
        %v459 = vmul.f32 %v336, %v457
        %v460 = vrot.slane %v336, 2
        %v462 = vmul.f32 %v459, %v460
        %465 = vrot.lane.b32.xlu0 %v337, 127
        %v466 = vpop.permute.xlu0 %465
        %467 = vrot.lane.b32.xlu0 %v338, 127
        %v468 = vpop.permute.xlu0 %467
        %v471 = vmul.f32 %v337, %v466
        %v472 = vmul.f32 %v338, %v468
        %473 = vrot.lane.b32.xlu0 %v337, 126
        %v474 = vpop.permute.xlu0 %473
        %475 = vrot.lane.b32.xlu0 %v338, 126
        %v476 = vpop.permute.xlu0 %475
        %v479 = vmul.f32 %v471, %v474
        %v480 = vmul.f32 %v472, %v476
        %v481 = vperm.slane %v462, 3
        %483 = vset.pattern.permute.xlu0 3
        %484 = vperm.xlu0 %483, %v479
        %v485 = vpop.permute.xlu0 %484
        %488 = vset.pattern.permute.xlu0 3
        %489 = vperm.xlu0 %488, %v480
        %v490 = vpop.permute.xlu0 %489
        %v492 = vadd.f32 %v481, %v485
        %v493 = vadd.f32 %v481, %v490
        %v494 = vsub.f32 %v492, %v454
        %v495 = vsub.f32 %v493, %v455
        %v496 = vmax.f32 %v494, 1e-06
        %v497 = vmax.f32 %v495, 1e-06
        %v498 = vrcp.pop %v496
        %v499 = vmul.f32 %v496, %v498
        %v500 = vsub.f32 1.0, %v499
        %v501 = vmul.f32 %v498, %v500
        %v502 = vadd.f32 %v498, %v501
        %vm503 = vweird.f32 %v496
        %vm504 = vweird.f32 %v498
        %vm505 = vmor %vm503, %vm504
        %v506 = vsel %vm505, %v498, %v502
        %v507 = vand.u32 2147483647, %v496
        %vm508 = vcmp.eq.f32.partialorder %v507, 8.507059e+37
        %v509 = vand.u32 %v496, 2147483648
        %v510 = vor.u32 1.1754944e-38, %v509
        %v511 = vsel %vm508, %v510, %v506
        %v512 = vmul.f32 %v454, %v511
        %v513 = vrcp.pop %v497
        %v514 = vmul.f32 %v497, %v513
        %v515 = vsub.f32 1.0, %v514
        %v516 = vmul.f32 %v513, %v515
        %v517 = vadd.f32 %v513, %v516
        %vm518 = vweird.f32 %v497
        %vm519 = vweird.f32 %v513
        %vm520 = vmor %vm518, %vm519
        %v521 = vsel %vm520, %v513, %v517
        %v522 = vand.u32 2147483647, %v497
        %vm523 = vcmp.eq.f32.partialorder %v522, 8.507059e+37
        %v524 = vand.u32 %v497, 2147483648
        %v525 = vor.u32 1.1754944e-38, %v524
        %v526 = vsel %vm523, %v525, %v521
        %v527 = vmul.f32 %v455, %v526
        %528 = vset.pattern.permute.xlu0 7
        %529 = vperm.xlu0 %528, %v337
        %v530 = vpop.permute.xlu0 %529
        %532 = vset.pattern.permute.xlu0 7
        %533 = vperm.xlu0 %532, %v338
        %v534 = vpop.permute.xlu0 %533
        %v536 = vperm.slane %v336, 7
        %vm537 = vcmp.eq.f32.partialorder %v530, %v536
        %vm538 = vcmp.eq.f32.partialorder %v534, %v536
        %v539 = vsel %vm348, 1, 0
        %v540 = vsel %vm349, 1, 0
        %vm541 = vcmp.eq.s32.totalorder %v539, 1
        %vm542 = vcmp.eq.s32.totalorder %v540, 1
        %vm543 = vmand %vm537, %vm541
        %vm544 = vmand %vm538, %vm542
        %v545 = vsel %vm543, %v512, -1.0
        %v546 = vsel %vm544, %v527, -1.0
        %v547 = vmax.f32 %v545, %v546
        %v548 = vrot.slane %v547, 4
        %v549 = vmax.f32 %v547, %v548
        %v550 = vrot.slane %v549, 2
        %v551 = vmax.f32 %v549, %v550
        %v552 = vrot.slane %v551, 1
        %v553 = vmax.f32 %v551, %v552
        %v554 = vlaneseq
        %v555 = vshrl.u32 %v554, 7
        %v556 = vadd.s32 %v555, 8
        %vm557 = vcmp.ge.f32.partialorder %v545, %v553
        %vm558 = vcmp.ge.f32.partialorder %v546, %v553
        %v559 = vsel %vm557, %v555, 16
        %v560 = vsel %vm558, %v556, 16
        %vm561 = vcmp.lt.s32.totalorder %v559, %v560
        %v562 = vsel %vm561, %v559, %v560
        %v563 = vrot.slane %v562, 4
        %vm564 = vcmp.lt.s32.totalorder %v562, %v563
        %v565 = vsel %vm564, %v562, %v563
        %v566 = vrot.slane %v565, 2
        %vm567 = vcmp.lt.s32.totalorder %v565, %v566
        %v568 = vsel %vm567, %v565, %v566
        %v569 = vrot.slane %v568, 1
        %vm570 = vcmp.lt.s32.totalorder %v568, %v569
        %v571 = vsel %vm570, %v568, %v569
        %vm572 = vcmp.eq.s32.totalorder %v555, %v571
        %vm573 = vcmp.eq.s32.totalorder %v556, %v571
        %v574 = vsel %vm572, 1, 0
        %v575 = vsel %vm573, 1, 0
        %v576 = vcvt.s32.f32 %v574
        %v577 = vcvt.s32.f32 %v575
        %vm578 = vcmp.lt.f32.partialorder %v553, 0.0
        %v579 = vsel %vm578, 0.0, %v553
        %580 = vst [vmem:[%s293] sm:$0x1] %v579
        %581 = vset.pattern.permute.xlu0 0
        %582 = vperm.xlu0 %581, %v337
        %v583 = vpop.permute.xlu0 %582
        %585 = vset.pattern.permute.xlu0 0
        %586 = vperm.xlu0 %585, %v338
        %v587 = vpop.permute.xlu0 %586
        %v589 = vmul.f32 %v576, %v583
        %v590 = vmul.f32 %v577, %v587
        %v591 = vadd.f32 %v589, %v590
        %v592 = vrot.slane %v591, 4
        %v593 = vadd.f32 %v591, %v592
        %v594 = vrot.slane %v593, 2
        %v595 = vadd.f32 %v593, %v594
        %v596 = vrot.slane %v595, 1
        %v597 = vadd.f32 %v595, %v596
        %598 = vset.pattern.permute.xlu0 1
        %599 = vperm.xlu0 %598, %v337
        %v600 = vpop.permute.xlu0 %599
        %602 = vset.pattern.permute.xlu0 1
        %603 = vperm.xlu0 %602, %v338
        %v604 = vpop.permute.xlu0 %603
        %v606 = vmul.f32 %v576, %v600
        %v607 = vmul.f32 %v577, %v604
        %v608 = vadd.f32 %v606, %v607
        %v609 = vrot.slane %v608, 4
        %v610 = vadd.f32 %v608, %v609
        %v611 = vrot.slane %v610, 2
        %v612 = vadd.f32 %v610, %v611
        %v613 = vrot.slane %v612, 1
        %v614 = vadd.f32 %v612, %v613
        %615 = vset.pattern.permute.xlu0 2
        %616 = vperm.xlu0 %615, %v337
        %v617 = vpop.permute.xlu0 %616
        %619 = vset.pattern.permute.xlu0 2
        %620 = vperm.xlu0 %619, %v338
        %v621 = vpop.permute.xlu0 %620
        %v623 = vmul.f32 %v576, %v617
        %v624 = vmul.f32 %v577, %v621
        %v625 = vadd.f32 %v623, %v624
        %v626 = vrot.slane %v625, 4
        %v627 = vadd.f32 %v625, %v626
        %v628 = vrot.slane %v627, 2
        %v629 = vadd.f32 %v627, %v628
        %v630 = vrot.slane %v629, 1
        %v631 = vadd.f32 %v629, %v630
        %632 = vset.pattern.permute.xlu0 3
        %633 = vperm.xlu0 %632, %v337
        %v634 = vpop.permute.xlu0 %633
        %636 = vset.pattern.permute.xlu0 3
        %637 = vperm.xlu0 %636, %v338
        %v638 = vpop.permute.xlu0 %637
        %v640 = vmul.f32 %v576, %v634
        %v641 = vmul.f32 %v577, %v638
        %v642 = vadd.f32 %v640, %v641
        %v643 = vrot.slane %v642, 4
        %v644 = vadd.f32 %v642, %v643
        %v645 = vrot.slane %v644, 2
        %v646 = vadd.f32 %v644, %v645
        %v647 = vrot.slane %v646, 1
        %v648 = vadd.f32 %v646, %v647
        %649 = vset.pattern.permute.xlu0 4
        %650 = vperm.xlu0 %649, %v337
        %v651 = vpop.permute.xlu0 %650
        %653 = vset.pattern.permute.xlu0 4
        %654 = vperm.xlu0 %653, %v338
        %v655 = vpop.permute.xlu0 %654
        %v657 = vmul.f32 %v576, %v651
        %v658 = vmul.f32 %v577, %v655
        %v659 = vadd.f32 %v657, %v658
        %v660 = vrot.slane %v659, 4
        %v661 = vadd.f32 %v659, %v660
        %v662 = vrot.slane %v661, 2
        %v663 = vadd.f32 %v661, %v662
        %v664 = vrot.slane %v663, 1
        %v665 = vadd.f32 %v663, %v664
        %666 = vset.pattern.permute.xlu0 5
        %667 = vperm.xlu0 %666, %v337
        %v668 = vpop.permute.xlu0 %667
        %670 = vset.pattern.permute.xlu0 5
        %671 = vperm.xlu0 %670, %v338
        %v672 = vpop.permute.xlu0 %671
        %v674 = vmul.f32 %v576, %v668
        %v675 = vmul.f32 %v577, %v672
        %v676 = vadd.f32 %v674, %v675
        %v677 = vrot.slane %v676, 4
        %v678 = vadd.f32 %v676, %v677
        %v679 = vrot.slane %v678, 2
        %v680 = vadd.f32 %v678, %v679
        %v681 = vrot.slane %v680, 1
        %v682 = vadd.f32 %v680, %v681
        %683 = vset.pattern.permute.xlu0 6
        %684 = vperm.xlu0 %683, %v337
        %v685 = vpop.permute.xlu0 %684
        %687 = vset.pattern.permute.xlu0 6
        %688 = vperm.xlu0 %687, %v338
        %v689 = vpop.permute.xlu0 %688
        %v691 = vmul.f32 %v576, %v685
        %v692 = vmul.f32 %v577, %v689
        %v693 = vadd.f32 %v691, %v692
        %v694 = vrot.slane %v693, 4
        %v695 = vadd.f32 %v693, %v694
        %v696 = vrot.slane %v695, 2
        %v697 = vadd.f32 %v695, %v696
        %v698 = vrot.slane %v697, 1
        %v699 = vadd.f32 %v697, %v698
        %v700 = vmul.f32 %v576, %v530
        %v701 = vmul.f32 %v577, %v534
        %v702 = vadd.f32 %v700, %v701
        %v703 = vrot.slane %v702, 4
        %v704 = vadd.f32 %v702, %v703
        %v705 = vrot.slane %v704, 2
        %v706 = vadd.f32 %v704, %v705
        %v707 = vrot.slane %v706, 1
        %v708 = vadd.f32 %v706, %v707
        %vm709 = vcmask 1040384
        %v710 = vsel %vm709, %v597, %v614
        %vm711 = vcmask 1041408
        %v712 = vsel %vm711, %v710, %v631
        %vm713 = vcmask 1042432
        %v714 = vsel %vm713, %v712, %v648
        %vm715 = vcmask 1043456
        %v716 = vsel %vm715, %v714, %v665
        %vm717 = vcmask 1044480
        %v718 = vsel %vm717, %v716, %v682
        %vm719 = vcmask 1045504
        %v720 = vsel %vm719, %v718, %v699
        %vm721 = vcmask 1046528
        %v722 = vsel %vm721, %v720, %v708
        %723 = vst [vmem:[%s300] sm:$0xff] %v722
        %vm724 = vcmp.gt.f32.partialorder %v579, 0.55
        %v725 = vsel %vm724, 1, 0
        %726 = vst [vmem:[%s312] sm:$0x1] %v725
        %vm727 = vcmp.gt.f32.partialorder %v579, 0.75
        %vm728 = vcmp.lt.f32.partialorder %v579, 0.25
        %v729 = vsub.f32 %v579, 0.25
        %v730 = vmul.f32 %v729, 2.0
        %v731 = vsel %vm728, 0.0, %v730
        %v732 = vsel %vm727, 1.0, %v731
        %733 = vst [vmem:[%s306] sm:$0x1] %v732
        %v734 = vsub.f32 %v597, %v336
        %v735 = vsub.f32 %v614, %v336
        %v736 = vsub.f32 %v631, %v336
        %v737 = vand.u32 2147483647, %v699
        %v738 = vrcp.pop 6.2831855
        %v739 = vmul.f32 6.2831855, %v738
        %v740 = vsub.f32 1.0, %v739
        %v741 = vmul.f32 %v738, %v740
        %v742 = vadd.f32 %v738, %v741
        %vm743 = vweird.f32 %v738
        %v744 = vsel %vm743, %v738, %v742
        %v745 = vmul.f32 %v737, %v744
        %v746 = vfloor.f32 %v745
        %v747 = vmul.f32 %v746, 6.2831855
        %v748 = vsub.f32 %v737, %v747
        %vm749 = vcmp.eq.f32.partialorder %v748, 6.2831855
        %v750 = vsel %vm749, 0.0, %v748
        %v751 = vand.u32 2147483647, %v750
        %v752 = vand.u32 %v699, 2147483648
        %v753 = vor.u32 %v751, %v752
        %vm754 = vcmp.ne.f32.partialorder %v753, 0.0
        %vm755 = vcmp.lt.f32.partialorder %v753, 0.0
        %vm756 = vmand %vm755, %vm754
        %v757 = vadd.f32 %v753, 6.2831855
        %v758 = vsel %vm756, %v757, %v753
        %v759 = vsub.f32 %v758, %v336
        %v760 = vand.u32 2147483647, %v336
        %vm761 = vcmp.le.f32.partialorder %v760, 0.7853982
        %vm762 = vcmp.lt.s32.totalorder %v336, 0
        %v763 = vand.u32 %v336, 2139095040
        %v764 = vshrl.u32 %v763, 23
        %v765 = vsub.s32 %v764, 127
        %v766 = vand.u32 2147483647, %v336
        %v767 = vand.u32 %v766, 8388607
        %v768 = vor.u32 %v767, 8388608
        %v769 = vsub.s32 0, %v768
        %v770 = vadd.s32 %v765, 1
        %vm771 = vcmp.gt.s32.totalorder %v770, 0
        %v772 = vsel %vm771, %v770, 0
        %v773 = vshrl.u32 %v772, 5
        %v774 = vand.u32 %v772, 31
        %v775 = vsub.s32 32, %v774
        %v776 = vshrl.u32 683565275, %v775
        %v777 = vshll.u32 683565275, %v774
        %v778 = vshrl.u32 2475754826, %v775
        %v779 = vor.u32 %v777, %v778
        %v780 = vshll.u32 2475754826, %v774
        %v781 = vshrl.u32 2131351028, %v775
        %v782 = vor.u32 %v780, %v781
        %v783 = vshll.u32 2131351028, %v774
        %v784 = vshrl.u32 2102212464, %v775
        %v785 = vor.u32 %v783, %v784
        %v786 = vshll.u32 2102212464, %v774
        %v787 = vshrl.u32 920167782, %v775
        %v788 = vor.u32 %v786, %v787
        %v789 = vshll.u32 920167782, %v774
        %v790 = vshrl.u32 1326507024, %v775
        %v791 = vor.u32 %v789, %v790
        %vm792 = vcmp.lt.s32.totalorder %v773, 1
        %vm793 = vcmp.lt.s32.totalorder %v773, 2
        %vm794 = vcmp.lt.s32.totalorder %v773, 3
        %vm795 = vcmp.lt.s32.totalorder %v773, 4
        %v796 = vsel %vm792, %v776, %v779
        %v797 = vsel %vm795, %v785, 2102212464
        %v798 = vsel %vm794, %v782, %v797
        %v799 = vsel %vm793, %v796, %v798
        %v800 = vsel %vm792, %v779, %v782
        %v801 = vsel %vm795, %v788, 920167782
        %v802 = vsel %vm794, %v785, %v801
        %v803 = vsel %vm793, %v800, %v802
        %v804 = vsel %vm792, %v782, %v785
        %v805 = vsel %vm795, %v791, 1326507024
        %v806 = vsel %vm794, %v788, %v805
        %v807 = vsel %vm793, %v804, %v806
        %v808 = vshll.u32 %v768, 8
        %v809 = vand.u32 %v808, 65535
        %v810 = vshrl.u32 %v808, 16
        %v811 = vand.u32 %v807, 65535
        %v812 = vshrl.u32 %v807, 16
        %v813 = vmul.u32 %v809, %v811
        %v814 = vmul.u32 %v809, %v812
        %v815 = vmul.u32 %v810, %v811
        %v816 = vmul.u32 %v810, %v812
        %v817 = vshll.u32 %v814, 16
        %v818 = vshrl.u32 %v814, 16
        %v819 = vshll.u32 %v815, 16
        %v820 = vshrl.u32 %v815, 16
        %vm821 = vc.u32 %v813, %v817
        %v822 = vsel %vm821, 1, 0
        %v823 = vadd.s32 %v813, %v817
        %v824 = vadd.s32 %v816, %v822
        %vm825 = vc.u32 %v823, %v819
        %v826 = vsel %vm825, 1, 0
        %v827 = vadd.s32 %v823, %v819
        %v828 = vadd.s32 %v824, %v826
        %v829 = vadd.s32 %v828, %v818
        %v830 = vadd.s32 %v829, %v820
        %v831 = vand.u32 %v808, 65535
        %v832 = vshrl.u32 %v808, 16
        %v833 = vand.u32 %v803, 65535
        %v834 = vshrl.u32 %v803, 16
        %v835 = vmul.u32 %v831, %v833
        %v836 = vmul.u32 %v831, %v834
        %v837 = vmul.u32 %v832, %v833
        %v838 = vmul.u32 %v832, %v834
        %v839 = vshll.u32 %v836, 16
        %v840 = vshrl.u32 %v836, 16
        %v841 = vshll.u32 %v837, 16
        %v842 = vshrl.u32 %v837, 16
        %vm843 = vc.u32 %v835, %v839
        %v844 = vsel %vm843, 1, 0
        %v845 = vadd.s32 %v835, %v839
        %v846 = vadd.s32 %v838, %v844
        %vm847 = vc.u32 %v845, %v841
        %v848 = vsel %vm847, 1, 0
        %v849 = vadd.s32 %v845, %v841
        %v850 = vadd.s32 %v846, %v848
        %v851 = vadd.s32 %v850, %v840
        %v852 = vadd.s32 %v851, %v842
        %v853 = vmul.u32 %v808, %v799
        %v854 = vadd.s32 %v830, %v849
        %vm855 = vc.u32 %v830, %v849
        %v856 = vadd.s32 %v852, 1
        %v857 = vsel %vm855, %v856, %v852
        %v858 = vadd.s32 %v853, %v857
        %v859 = vadd.s32 %v858, 536870912
        %v860 = vshrl.u32 %v859, 30
        %v861 = vshll.u32 %v860, 30
        %v862 = vsub.s32 %v858, %v861
        %vm863 = vcmp.lt.s32.totalorder %v862, 0
        %v864 = vsub.s32 0, %v862
        %v865 = vsel %vm863, %v864, %v862
        %v866 = vclz %v865
        %v867 = vsub.s32 %v866, 2
        %vm868 = vcmp.gt.s32.totalorder 0, %v867
        %v869 = vsel %vm868, 0, %v867
        %v870 = vsub.s32 32, %v869
        %v871 = vshll.u32 %v862, %v869
        %v872 = vshrl.u32 %v854, %v870
        %v873 = vor.u32 %v871, %v872
        %v874 = vsub.s32 4294967266, %v869
        %v875 = vadd.s32 %v874, 127
        %v876 = vshll.u32 %v875, 23
        %v877 = vor.u32 4788187, %v876
        %v878 = vand.u32 2147483647, %v877
        %v880 = vcvt.s32.f32 %v873
        %v881 = vmul.f32 %v880, %v878
        %v882 = vxor.u32 %v881, 2147483648
        %v883 = vsel %vm762, %v882, %v881
        %v884 = vsub.s32 4, %v860
        %v885 = vsel %vm762, %v884, %v860
        %v886 = vsel %vm761, %v336, %v883
        %v887 = vsel %vm761, 0, %v885
        %v888 = vmul.f32 %v886, %v886
        %v889 = vmul.f32 %v888, -0.001358992
        %v890 = vadd.f32 %v889, 0.041655596
        %v891 = vmul.f32 %v888, %v890
        %v892 = vadd.f32 %v891, -0.4999988
        %v893 = vmul.f32 %v888, %v892
        %v894 = vadd.f32 1.0, %v893
        %v895 = vmul.f32 %v886, %v886
        %v896 = vmul.f32 %v895, -0.00019511016
        %v897 = vadd.f32 %v896, 0.008332121
        %v898 = vmul.f32 %v895, %v897
        %v899 = vadd.f32 %v898, -0.16666654
        %v900 = vmul.f32 %v895, %v899
        %v901 = vadd.f32 %v900, 1.0
        %v902 = vmul.f32 %v901, %v886
        %vm903 = vweird.f32 %v336
        %v904 = vand.u32 %v887, 3
        %vm905 = vcmp.lt.s32.totalorder %v904, 2
        %vm906 = vcmp.eq.s32.totalorder %v904, 0
        %v907 = vxor.u32 %v902, 2147483648
        %v908 = vsel %vm906, %v894, %v907
        %vm909 = vcmp.eq.s32.totalorder %v904, 2
        %v910 = vxor.u32 %v894, 2147483648
        %v911 = vsel %vm909, %v910, %v902
        %v912 = vsel %vm905, %v908, %v911
        %v913 = vsel %vm903, nan, %v912
        %v914 = vand.u32 2147483647, %v336
        %vm915 = vcmp.le.f32.partialorder %v914, 0.7853982
        %vm916 = vcmp.lt.s32.totalorder %v336, 0
        %v917 = vand.u32 %v336, 2139095040
        %v918 = vshrl.u32 %v917, 23
        %v919 = vsub.s32 %v918, 127
        %v920 = vand.u32 2147483647, %v336
        %v921 = vand.u32 %v920, 8388607
        %v922 = vor.u32 %v921, 8388608
        %v923 = vsub.s32 0, %v922
        %v924 = vadd.s32 %v919, 1
        %vm925 = vcmp.gt.s32.totalorder %v924, 0
        %v926 = vsel %vm925, %v924, 0
        %v927 = vshrl.u32 %v926, 5
        %v928 = vand.u32 %v926, 31
        %v929 = vsub.s32 32, %v928
        %v930 = vshrl.u32 683565275, %v929
        %v931 = vshll.u32 683565275, %v928
        %v932 = vshrl.u32 2475754826, %v929
        %v933 = vor.u32 %v931, %v932
        %v934 = vshll.u32 2475754826, %v928
        %v935 = vshrl.u32 2131351028, %v929
        %v936 = vor.u32 %v934, %v935
        %v937 = vshll.u32 2131351028, %v928
        %v938 = vshrl.u32 2102212464, %v929
        %v939 = vor.u32 %v937, %v938
        %v940 = vshll.u32 2102212464, %v928
        %v941 = vshrl.u32 920167782, %v929
        %v942 = vor.u32 %v940, %v941
        %v943 = vshll.u32 920167782, %v928
        %v944 = vshrl.u32 1326507024, %v929
        %v945 = vor.u32 %v943, %v944
        %vm946 = vcmp.lt.s32.totalorder %v927, 1
        %vm947 = vcmp.lt.s32.totalorder %v927, 2
        %vm948 = vcmp.lt.s32.totalorder %v927, 3
        %vm949 = vcmp.lt.s32.totalorder %v927, 4
        %v950 = vsel %vm946, %v930, %v933
        %v951 = vsel %vm949, %v939, 2102212464
        %v952 = vsel %vm948, %v936, %v951
        %v953 = vsel %vm947, %v950, %v952
        %v954 = vsel %vm946, %v933, %v936
        %v955 = vsel %vm949, %v942, 920167782
        %v956 = vsel %vm948, %v939, %v955
        %v957 = vsel %vm947, %v954, %v956
        %v958 = vsel %vm946, %v936, %v939
        %v959 = vsel %vm949, %v945, 1326507024
        %v960 = vsel %vm948, %v942, %v959
        %v961 = vsel %vm947, %v958, %v960
        %v962 = vshll.u32 %v922, 8
        %v963 = vand.u32 %v962, 65535
        %v964 = vshrl.u32 %v962, 16
        %v965 = vand.u32 %v961, 65535
        %v966 = vshrl.u32 %v961, 16
        %v967 = vmul.u32 %v963, %v965
        %v968 = vmul.u32 %v963, %v966
        %v969 = vmul.u32 %v964, %v965
        %v970 = vmul.u32 %v964, %v966
        %v971 = vshll.u32 %v968, 16
        %v972 = vshrl.u32 %v968, 16
        %v973 = vshll.u32 %v969, 16
        %v974 = vshrl.u32 %v969, 16
        %vm975 = vc.u32 %v967, %v971
        %v976 = vsel %vm975, 1, 0
        %v977 = vadd.s32 %v967, %v971
        %v978 = vadd.s32 %v970, %v976
        %vm979 = vc.u32 %v977, %v973
        %v980 = vsel %vm979, 1, 0
        %v981 = vadd.s32 %v977, %v973
        %v982 = vadd.s32 %v978, %v980
        %v983 = vadd.s32 %v982, %v972
        %v984 = vadd.s32 %v983, %v974
        %v985 = vand.u32 %v962, 65535
        %v986 = vshrl.u32 %v962, 16
        %v987 = vand.u32 %v957, 65535
        %v988 = vshrl.u32 %v957, 16
        %v989 = vmul.u32 %v985, %v987
        %v990 = vmul.u32 %v985, %v988
        %v991 = vmul.u32 %v986, %v987
        %v992 = vmul.u32 %v986, %v988
        %v993 = vshll.u32 %v990, 16
        %v994 = vshrl.u32 %v990, 16
        %v995 = vshll.u32 %v991, 16
        %v996 = vshrl.u32 %v991, 16
        %vm997 = vc.u32 %v989, %v993
        %v998 = vsel %vm997, 1, 0
        %v999 = vadd.s32 %v989, %v993
        %v1000 = vadd.s32 %v992, %v998
        %vm1001 = vc.u32 %v999, %v995
        %v1002 = vsel %vm1001, 1, 0
        %v1003 = vadd.s32 %v999, %v995
        %v1004 = vadd.s32 %v1000, %v1002
        %v1005 = vadd.s32 %v1004, %v994
        %v1006 = vadd.s32 %v1005, %v996
        %v1007 = vmul.u32 %v962, %v953
        %v1008 = vadd.s32 %v984, %v1003
        %vm1009 = vc.u32 %v984, %v1003
        %v1010 = vadd.s32 %v1006, 1
        %v1011 = vsel %vm1009, %v1010, %v1006
        %v1012 = vadd.s32 %v1007, %v1011
        %v1013 = vadd.s32 %v1012, 536870912
        %v1014 = vshrl.u32 %v1013, 30
        %v1015 = vshll.u32 %v1014, 30
        %v1016 = vsub.s32 %v1012, %v1015
        %vm1017 = vcmp.lt.s32.totalorder %v1016, 0
        %v1018 = vsub.s32 0, %v1016
        %v1019 = vsel %vm1017, %v1018, %v1016
        %v1020 = vclz %v1019
        %v1021 = vsub.s32 %v1020, 2
        %vm1022 = vcmp.gt.s32.totalorder 0, %v1021
        %v1023 = vsel %vm1022, 0, %v1021
        %v1024 = vsub.s32 32, %v1023
        %v1025 = vshll.u32 %v1016, %v1023
        %v1026 = vshrl.u32 %v1008, %v1024
        %v1027 = vor.u32 %v1025, %v1026
        %v1028 = vsub.s32 4294967266, %v1023
        %v1029 = vadd.s32 %v1028, 127
        %v1030 = vshll.u32 %v1029, 23
        %v1031 = vor.u32 4788187, %v1030
        %v1032 = vand.u32 2147483647, %v1031
        %v1034 = vcvt.s32.f32 %v1027
        %v1035 = vmul.f32 %v1034, %v1032
        %v1036 = vxor.u32 %v1035, 2147483648
        %v1037 = vsel %vm916, %v1036, %v1035
        %v1038 = vsub.s32 4, %v1014
        %v1039 = vsel %vm916, %v1038, %v1014
        %v1040 = vsel %vm915, %v336, %v1037
        %v1041 = vsel %vm915, 0, %v1039
        %v1042 = vmul.f32 %v1040, %v1040
        %v1043 = vmul.f32 %v1042, -0.001358992
        %v1044 = vadd.f32 %v1043, 0.041655596
        %v1045 = vmul.f32 %v1042, %v1044
        %v1046 = vadd.f32 %v1045, -0.4999988
        %v1047 = vmul.f32 %v1042, %v1046
        %v1048 = vadd.f32 1.0, %v1047
        %v1049 = vmul.f32 %v1040, %v1040
        %v1050 = vmul.f32 %v1049, -0.00019511016
        %v1051 = vadd.f32 %v1050, 0.008332121
        %v1052 = vmul.f32 %v1049, %v1051
        %v1053 = vadd.f32 %v1052, -0.16666654
        %v1054 = vmul.f32 %v1049, %v1053
        %v1055 = vadd.f32 %v1054, 1.0
        %v1056 = vmul.f32 %v1055, %v1040
        %vm1057 = vweird.f32 %v336
        %v1058 = vadd.s32 %v1041, 3
        %v1059 = vand.u32 %v1058, 3
        %vm1060 = vcmp.lt.s32.totalorder %v1059, 2
        %vm1061 = vcmp.eq.s32.totalorder %v1059, 0
        %v1062 = vxor.u32 %v1056, 2147483648
        %v1063 = vsel %vm1061, %v1048, %v1062
        %vm1064 = vcmp.eq.s32.totalorder %v1059, 2
        %v1065 = vxor.u32 %v1048, 2147483648
        %v1066 = vsel %vm1064, %v1065, %v1056
        %v1067 = vsel %vm1060, %v1063, %v1066
        %v1068 = vsel %vm1057, nan, %v1067
        %v1070 = vrot.slane %v913, 6
        %v1072 = vmul.f32 %v734, %v1070
        %v1074 = vrot.slane %v1068, 5
        %v1076 = vmul.f32 %v735, %v1074
        %v1078 = vrot.slane %v1076, 1
        %v1080 = vadd.f32 %v1072, %v1078
        %v1081 = vsub.f32 0.0, %v734
        %v1082 = vrot.slane %v1068, 6
        %v1084 = vmul.f32 %v1081, %v1082
        %v1085 = vrot.slane %v913, 5
        %v1087 = vmul.f32 %v735, %v1085
        %v1089 = vrot.slane %v1087, 1
        %v1091 = vadd.f32 %v1084, %v1089
        %v1092 = vand.u32 2147483647, %v759
        %v1093 = vrcp.pop 6.2831855
        %v1094 = vmul.f32 6.2831855, %v1093
        %v1095 = vsub.f32 1.0, %v1094
        %v1096 = vmul.f32 %v1093, %v1095
        %v1097 = vadd.f32 %v1093, %v1096
        %vm1098 = vweird.f32 %v1093
        %v1099 = vsel %vm1098, %v1093, %v1097
        %v1100 = vmul.f32 %v1092, %v1099
        %v1101 = vfloor.f32 %v1100
        %v1102 = vmul.f32 %v1101, 6.2831855
        %v1103 = vsub.f32 %v1092, %v1102
        %vm1104 = vcmp.eq.f32.partialorder %v1103, 6.2831855
        %v1105 = vsel %vm1104, 0.0, %v1103
        %v1106 = vand.u32 2147483647, %v1105
        %v1107 = vand.u32 %v759, 2147483648
        %v1108 = vor.u32 %v1106, %v1107
        %vm1109 = vcmp.ne.f32.partialorder %v1108, 0.0
        %vm1110 = vcmp.lt.f32.partialorder %v1108, 0.0
        %vm1111 = vmand %vm1110, %vm1109
        %v1112 = vadd.f32 %v1108, 6.2831855
        %v1113 = vsel %vm1111, %v1112, %v1108
        %vm1114 = vcmp.gt.f32.partialorder %v1113, 1.5707964
        %vm1115 = vcmp.lt.f32.partialorder %v1113, 4.712389
        %vm1116 = vmand %vm1114, %vm1115
        %v1117 = vsub.f32 %v1113, 3.1415927
        %v1118 = vand.u32 2147483647, %v1117
        %v1119 = vrcp.pop 6.2831855
        %v1120 = vmul.f32 6.2831855, %v1119
        %v1121 = vsub.f32 1.0, %v1120
        %v1122 = vmul.f32 %v1119, %v1121
        %v1123 = vadd.f32 %v1119, %v1122
        %vm1124 = vweird.f32 %v1119
        %v1125 = vsel %vm1124, %v1119, %v1123
        %v1126 = vmul.f32 %v1118, %v1125
        %v1127 = vfloor.f32 %v1126
        %v1128 = vmul.f32 %v1127, 6.2831855
        %v1129 = vsub.f32 %v1118, %v1128
        %vm1130 = vcmp.eq.f32.partialorder %v1129, 6.2831855
        %v1131 = vsel %vm1130, 0.0, %v1129
        %v1132 = vand.u32 2147483647, %v1131
        %v1133 = vand.u32 %v1117, 2147483648
        %v1134 = vor.u32 %v1132, %v1133
        %vm1135 = vcmp.ne.f32.partialorder %v1134, 0.0
        %vm1136 = vcmp.lt.f32.partialorder %v1134, 0.0
        %vm1137 = vmand %vm1136, %vm1135
        %v1138 = vadd.f32 %v1134, 6.2831855
        %v1139 = vsel %vm1137, %v1138, %v1134
        %v1140 = vsel %vm1116, %v1139, %v1113
        %vm1141 = vcmp.gt.f32.partialorder %v1140, 3.1415927
        %v1142 = vsub.f32 %v1140, 6.2831855
        %v1143 = vsel %vm1141, %v1142, %v1140
        %v1144 = vmax.f32 %v1143, -1.5707964
        %v1145 = vmin.f32 %v1144, 1.5707964
        %v1147 = vrot.slane %v1091, 7
        %v1149 = vsel %vm709, %v1080, %v1147
        %v1150 = vsel %vm711, %v1149, %v736
        %v1151 = vsel %vm713, %v1150, %v648
        %v1152 = vsel %vm715, %v1151, %v665
        %v1153 = vsel %vm717, %v1152, %v682
        %v1154 = vsel %vm719, %v1153, %v1145
        %v1155 = vsel %vm721, %v1154, %v708
        %1156 = vst [vmem:[%s319] sm:$0xff] %v1155
        %v1157 = vmax.f32 %v336, 1e-05
        %v1158 = vmax.f32 %v648, 1e-05
        %v1159 = vmax.f32 %v665, 1e-05
        %v1160 = vmax.f32 %v682, 1e-05
        %v1161 = vmul.f32 %v1157, %v1157
        %v1163 = vrot.slane %v1161, 1
        %v1165 = vadd.f32 %v1161, %v1163
        %v1166 = vrsqrt.pop %v1165
        %v1167 = vmul.f32 %v1166, %v1165
        %v1168 = vmul.f32 %v1167, %v1166
        %v1169 = vmul.f32 0.5, %v1168
        %v1170 = vsub.f32 1.5, %v1169
        %v1171 = vmul.f32 %v1166, %v1170
        %v1172 = vmul.f32 %v1165, %v1171
        %vm1173 = vcmp.eq.f32.partialorder %v1165, inf
        %v1174 = vsel %vm1173, %v1165, %v1172
        %vm1175 = vcmp.eq.f32.partialorder %v1165, 0.0
        %v1176 = vand.u32 %v1165, 2147483648
        %v1177 = vsel %vm1175, %v1176, %v1174
        %v1178 = vrcp.pop %v1177
        %v1179 = vmul.f32 %v1177, %v1178
        %v1180 = vsub.f32 1.0, %v1179
        %v1181 = vmul.f32 %v1178, %v1180
        %v1182 = vadd.f32 %v1178, %v1181
        %vm1183 = vweird.f32 %v1177
        %vm1184 = vweird.f32 %v1178
        %vm1185 = vmor %vm1183, %vm1184
        %v1186 = vsel %vm1185, %v1178, %v1182
        %v1187 = vand.u32 2147483647, %v1177
        %vm1188 = vcmp.eq.f32.partialorder %v1187, 8.507059e+37
        %v1189 = vand.u32 %v1177, 2147483648
        %v1190 = vor.u32 1.1754944e-38, %v1189
        %v1191 = vsel %vm1188, %v1190, %v1186
        %v1192 = vmul.f32 1.0, %v1191
        %v1194 = vrot.slane %v1192, 3
        %v1196 = vmul.f32 %v1080, %v1194
        %v1197 = vmul.f32 %v1091, %v1194
        %v1199 = vrot.slane %v1157, 3
        %v1201 = vrcp.pop %v1199
        %v1202 = vmul.f32 %v1199, %v1201
        %v1203 = vsub.f32 1.0, %v1202
        %v1204 = vmul.f32 %v1201, %v1203
        %v1205 = vadd.f32 %v1201, %v1204
        %vm1206 = vweird.f32 %v1199
        %vm1207 = vweird.f32 %v1201
        %vm1208 = vmor %vm1206, %vm1207
        %v1209 = vsel %vm1208, %v1201, %v1205
        %v1210 = vand.u32 2147483647, %v1199
        %vm1211 = vcmp.eq.f32.partialorder %v1210, 8.507059e+37
        %v1212 = vand.u32 %v1199, 2147483648
        %v1213 = vor.u32 1.1754944e-38, %v1212
        %v1214 = vsel %vm1211, %v1213, %v1209
        %v1215 = vmul.f32 %v736, %v1214
        %v1216 = vrcp.pop %v1157
        %v1217 = vmul.f32 %v1157, %v1216
        %v1218 = vsub.f32 1.0, %v1217
        %v1219 = vmul.f32 %v1216, %v1218
        %v1220 = vadd.f32 %v1216, %v1219
        %vm1221 = vweird.f32 %v1157
        %vm1222 = vweird.f32 %v1216
        %vm1223 = vmor %vm1221, %vm1222
        %v1224 = vsel %vm1223, %v1216, %v1220
        %v1225 = vand.u32 2147483647, %v1157
        %vm1226 = vcmp.eq.f32.partialorder %v1225, 8.507059e+37
        %v1227 = vand.u32 %v1157, 2147483648
        %v1228 = vor.u32 1.1754944e-38, %v1227
        %v1229 = vsel %vm1226, %v1228, %v1224
        %v1230 = vmul.f32 %v1158, %v1229
        %v1231 = vlog2.pop %v1230
        %v1232 = vmul.f32 %v1231, 0.6931472
        %v1233 = vmul.f32 %v1159, %v1229
        %v1234 = vlog2.pop %v1233
        %v1235 = vmul.f32 %v1234, 0.6931472
        %v1236 = vmul.f32 %v1160, %v1229
        %v1237 = vlog2.pop %v1236
        %v1238 = vmul.f32 %v1237, 0.6931472
        %v1240 = vrot.slane %v1197, 7
        %v1242 = vsel %vm709, %v1196, %v1240
        %v1243 = vsel %vm711, %v1242, %v1215
        %v1244 = vsel %vm713, %v1243, %v1232
        %v1245 = vsel %vm715, %v1244, %v1235
        %v1246 = vsel %vm717, %v1245, %v1238
        %v1247 = vsel %vm719, %v1246, %v1145
        %v1248 = vsel %vm721, %v1247, 0.0
        %1249 = vst [vmem:[%s326] sm:$0xff] %v1248
        %s1250 = sand.u32 %s91, 1
        %s1251 = scalar_lea.sflag [#allocation3], %s1250
        %s1252 = sand.u32 %s91, 1
        %s1253 = scalar_lea.vmem [#allocation2], %s1252
        %s1254 = sand.u32 %s31, 1
        %s1255 = scalar_lea.sflag [#allocation5], %s1254
        %s1256 = sand.u32 %s117, 1
        %s1257 = smul.addr %s1256, 8
        %s1258 = scalar_lea.vmem [#allocation4], %s1257
        %s1259 = sand.u32 %s31, 1
        %s1260 = scalar_lea.sflag [#allocation5], %s1259
        %s1261 = sand.u32 %s143, 1
        %s1262 = scalar_lea.vmem [#allocation6], %s1261
        %s1263 = sand.u32 %s31, 1
        %s1264 = scalar_lea.sflag [#allocation8], %s1263
        %s1265 = sand.u32 %s169, 1
        %s1266 = scalar_lea.vmem [#allocation7], %s1265
        %s1267 = sand.u32 %s31, 1
        %s1268 = scalar_lea.sflag [#allocation8], %s1267
        %s1269 = sand.u32 %s195, 1
        %s1270 = smul.addr %s1269, 8
        %s1271 = scalar_lea.vmem [#allocation9], %s1270
        %s1272 = sand.u32 %s221, 1
        %s1273 = scalar_lea.sflag [#allocation11], %s1272
        %s1274 = sand.u32 %s221, 1
        %s1275 = smul.addr %s1274, 8
        %s1276 = scalar_lea.vmem [#allocation10], %s1275
        // Predicated region
        $region29: #{tpu_custom_call.1} parent=27 // pred_check
          %p1277 = pneg %p101
        $region30: #{tpu_custom_call.1} parent=27 // pred_check_branch
          %1279 = sbr.rel (%p1277) target = $region32
        $region31: #{tpu_custom_call.1} parent=27 // pred_region
          %1281 = vsyncadd %s1251, 0
          %s1282 = scalar_lea.hbm %s2, %s31
          %s1284 = sshll.u32 %s1253, 4
          %s1285 = int_to_ptr.vmem [resolvable:$true] %s1284
          %s1286 = sshll.u32 %s1282, 4
          %s1287 = int_to_ptr.hbm [resolvable:$true] %s1286
          %1289 = dma.vmem_to_hbm [thread:$0]  %s1285, 16, %s1287, %s1251
        $region32: #{tpu_custom_call.1} parent=27 // pred_fallthru
          _
        // Predicated region
        $region33: #{tpu_custom_call.1} parent=27 // pred_check
          %p1290 = pneg %p127
        $region34: #{tpu_custom_call.1} parent=27 // pred_check_branch
          %1292 = sbr.rel (%p1290) target = $region36
        $region35: #{tpu_custom_call.1} parent=27 // pred_region
          %1294 = vsyncadd %s1255, 0
          %s1295 = smul.addr %s31, 8
          %s1296 = scalar_lea.hbm %s3, %s1295
          %s1298 = sshll.u32 %s1258, 4
          %s1299 = int_to_ptr.vmem [resolvable:$true] %s1298
          %s1300 = sshll.u32 %s1296, 4
          %s1301 = int_to_ptr.hbm [resolvable:$true] %s1300
          %1303 = dma.vmem_to_hbm [thread:$0]  %s1299, 128, %s1301, %s1255
        $region36: #{tpu_custom_call.1} parent=27 // pred_fallthru
          _
        // Predicated region
        $region37: #{tpu_custom_call.1} parent=27 // pred_check
          %p1304 = pneg %p153
        $region38: #{tpu_custom_call.1} parent=27 // pred_check_branch
          %1306 = sbr.rel (%p1304) target = $region40
        $region39: #{tpu_custom_call.1} parent=27 // pred_region
          %1308 = vsyncadd %s1260, 0
          %s1309 = scalar_lea.hbm %s4, %s31
          %s1311 = sshll.u32 %s1262, 4
          %s1312 = int_to_ptr.vmem [resolvable:$true] %s1311
          %s1313 = sshll.u32 %s1309, 4
          %s1314 = int_to_ptr.hbm [resolvable:$true] %s1313
          %1316 = dma.vmem_to_hbm [thread:$0]  %s1312, 16, %s1314, %s1260
        $region40: #{tpu_custom_call.1} parent=27 // pred_fallthru
          _
        // Predicated region
        $region41: #{tpu_custom_call.1} parent=27 // pred_check
          %p1317 = pneg %p179
        $region42: #{tpu_custom_call.1} parent=27 // pred_check_branch
          %1319 = sbr.rel (%p1317) target = $region44
        $region43: #{tpu_custom_call.1} parent=27 // pred_region
          %1321 = vsyncadd %s1264, 0
          %s1322 = scalar_lea.hbm %s5, %s31
          %s1324 = sshll.u32 %s1266, 4
          %s1325 = int_to_ptr.vmem [resolvable:$true] %s1324
          %s1326 = sshll.u32 %s1322, 4
          %s1327 = int_to_ptr.hbm [resolvable:$true] %s1326
          %1329 = dma.vmem_to_hbm [thread:$0]  %s1325, 16, %s1327, %s1264
        $region44: #{tpu_custom_call.1} parent=27 // pred_fallthru
          _
        // Predicated region
        $region45: #{tpu_custom_call.1} parent=27 // pred_check
          %p1330 = pneg %p205
        $region46: #{tpu_custom_call.1} parent=27 // pred_check_branch
          %1332 = sbr.rel (%p1330) target = $region48
        $region47: #{tpu_custom_call.1} parent=27 // pred_region
          %1334 = vsyncadd %s1268, 0
          %s1335 = smul.addr %s31, 8
          %s1336 = scalar_lea.hbm %s6, %s1335
          %s1338 = sshll.u32 %s1271, 4
          %s1339 = int_to_ptr.vmem [resolvable:$true] %s1338
          %s1340 = sshll.u32 %s1336, 4
          %s1341 = int_to_ptr.hbm [resolvable:$true] %s1340
          %1343 = dma.vmem_to_hbm [thread:$0]  %s1339, 128, %s1341, %s1268
        $region48: #{tpu_custom_call.1} parent=27 // pred_fallthru
          _
        // Predicated region
        $region49: #{tpu_custom_call.1} parent=27 // pred_check
          %p1344 = pneg %p231
        $region50: #{tpu_custom_call.1} parent=27 // pred_check_branch
          %1346 = sbr.rel (%p1344) target = $region52
        $region51: #{tpu_custom_call.1} parent=27 // pred_region
          %1348 = vsyncadd %s1273, 0
          %s1349 = smul.addr %s31, 8
          %s1350 = scalar_lea.hbm %s7, %s1349
          %s1352 = sshll.u32 %s1276, 4
          %s1353 = int_to_ptr.vmem [resolvable:$true] %s1352
          %s1354 = sshll.u32 %s1350, 4
          %s1355 = int_to_ptr.hbm [resolvable:$true] %s1354
          %1357 = dma.vmem_to_hbm [thread:$0]  %s1353, 128, %s1355, %s1273
        $region52: #{tpu_custom_call.1} parent=27 // pred_fallthru
          _
      $region28: #{tpu_custom_call.1} parent=5 // pred_fallthru
        _
      %p1358 = scmp.le.s32.totalorder 2, %s26
      // Predicated region
      $region53: #{tpu_custom_call.1} parent=5 // pred_check
        %p1359 = pneg %p1358
      $region54: #{tpu_custom_call.1} parent=5 // pred_check_branch
        %1361 = sbr.rel (%p1359) target = $region56
      $region55: #{tpu_custom_call.1} parent=5 // pred_region
        %s1362 = ssub.s32 %s26, 2
        // Predicated region
        $region57: #{tpu_custom_call.1} parent=55 // pred_check
          %p1363 = pneg %p107
        $region58: #{tpu_custom_call.1} parent=55 // pred_check_branch
          %1365 = sbr.rel (%p1363) target = $region60
        $region59: #{tpu_custom_call.1} parent=55 // pred_region
          %s1366 = sand.u32 %s92, 1
          %s1367 = scalar_lea.sflag [#allocation3], %s1366
          %s1368 = sand.u32 %s92, 1
          %s1369 = scalar_lea.vmem [#allocation2], %s1368
          %1371 = dma.done %s1367, 16
        $region60: #{tpu_custom_call.1} parent=55 // pred_fallthru
          _
        // Predicated region
        $region61: #{tpu_custom_call.1} parent=55 // pred_check
          %p1372 = pneg %p133
        $region62: #{tpu_custom_call.1} parent=55 // pred_check_branch
          %1374 = sbr.rel (%p1372) target = $region64
        $region63: #{tpu_custom_call.1} parent=55 // pred_region
          %s1375 = sand.u32 %s32, 1
          %s1376 = scalar_lea.sflag [#allocation5], %s1375
          %s1377 = sand.u32 %s118, 1
          %s1378 = smul.addr %s1377, 8
          %s1379 = scalar_lea.vmem [#allocation4], %s1378
          %1381 = dma.done %s1376, 128
        $region64: #{tpu_custom_call.1} parent=55 // pred_fallthru
          _
        // Predicated region
        $region65: #{tpu_custom_call.1} parent=55 // pred_check
          %p1382 = pneg %p159
        $region66: #{tpu_custom_call.1} parent=55 // pred_check_branch
          %1384 = sbr.rel (%p1382) target = $region68
        $region67: #{tpu_custom_call.1} parent=55 // pred_region
          %s1385 = sand.u32 %s32, 1
          %s1386 = scalar_lea.sflag [#allocation5], %s1385
          %s1387 = sand.u32 %s144, 1
          %s1388 = scalar_lea.vmem [#allocation6], %s1387
          %1390 = dma.done %s1386, 16
        $region68: #{tpu_custom_call.1} parent=55 // pred_fallthru
          _
        // Predicated region
        $region69: #{tpu_custom_call.1} parent=55 // pred_check
          %p1391 = pneg %p185
        $region70: #{tpu_custom_call.1} parent=55 // pred_check_branch
          %1393 = sbr.rel (%p1391) target = $region72
        $region71: #{tpu_custom_call.1} parent=55 // pred_region
          %s1394 = sand.u32 %s32, 1
          %s1395 = scalar_lea.sflag [#allocation8], %s1394
          %s1396 = sand.u32 %s170, 1
          %s1397 = scalar_lea.vmem [#allocation7], %s1396
          %1399 = dma.done %s1395, 16
        $region72: #{tpu_custom_call.1} parent=55 // pred_fallthru
          _
        // Predicated region
        $region73: #{tpu_custom_call.1} parent=55 // pred_check
          %p1400 = pneg %p211
        $region74: #{tpu_custom_call.1} parent=55 // pred_check_branch
          %1402 = sbr.rel (%p1400) target = $region76
        $region75: #{tpu_custom_call.1} parent=55 // pred_region
          %s1403 = sand.u32 %s32, 1
          %s1404 = scalar_lea.sflag [#allocation8], %s1403
          %s1405 = sand.u32 %s196, 1
          %s1406 = smul.addr %s1405, 8
          %s1407 = scalar_lea.vmem [#allocation9], %s1406
          %1409 = dma.done %s1404, 128
        $region76: #{tpu_custom_call.1} parent=55 // pred_fallthru
          _
        // Predicated region
        $region77: #{tpu_custom_call.1} parent=55 // pred_check
          %p1410 = pneg %p237
        $region78: #{tpu_custom_call.1} parent=55 // pred_check_branch
          %1412 = sbr.rel (%p1410) target = $region80
        $region79: #{tpu_custom_call.1} parent=55 // pred_region
          %s1413 = sand.u32 %s222, 1
          %s1414 = scalar_lea.sflag [#allocation11], %s1413
          %s1415 = sand.u32 %s222, 1
          %s1416 = smul.addr %s1415, 8
          %s1417 = scalar_lea.vmem [#allocation10], %s1416
          %1419 = dma.done %s1414, 128
        $region80: #{tpu_custom_call.1} parent=55 // pred_fallthru
          _
      $region56: #{tpu_custom_call.1} parent=5 // pred_fallthru
        _
    $region6: #{tpu_custom_call.1} parent=1 // loop_footer
      %s30 = sadd.s32 1, %s26
    $region7: #{tpu_custom_call.1} parent=1 // loop_footer_branch
      %25 = sbr.rel target = $region3
    $region8: #{tpu_custom_call.1} parent=1 // loop_exit
      _
    %1420 = vsyncpa [#allocation3], 1
    %s1421 = scalar_lea.sflag [#allocation3], 1
    %1422 = vsyncpa %s1421, 1
    %1423 = vsyncpa [#allocation5], 1
    %s1424 = scalar_lea.sflag [#allocation5], 1
    %1425 = vsyncpa %s1424, 1
    %1426 = vsyncpa [#allocation8], 1
    %s1427 = scalar_lea.sflag [#allocation8], 1
    %1428 = vsyncpa %s1427, 1
    %1429 = vsyncpa [#allocation11], 1
    %s1430 = scalar_lea.sflag [#allocation11], 1
    %1431 = vsyncpa %s1430, 1

</llo_original>
